<compile_context>
chip_gen: v7x
topology: tpu7x:2x2x1
jax: 0.10.0
libtpu: 0.0.40
codegen_flags: <defaults>
</compile_context>

<pallas_src>
import math
import numpy as np

import jax
import jax.numpy as jnp
from jax.experimental import pallas as pl
from jax.experimental.pallas import tpu as pltpu

# ---- model hyper-parameters (small, consistent with the module) -------------
B, S, D = 2, 8, 32          # batch, seq_len, d_model
NHEAD = 4
HEAD = D // NHEAD
L = 2                       # num_layers
FF = 64                     # dim_feedforward
VOCAB = 50                  # vocab_size
VOCAB_PAD = 56              # vocab rows padded to a multiple of 8
MAXLEN = 16                 # max_len for positional encoding
MLP_H = 32                  # mlp_hidden_dims = [32]
OUT = 4                     # output_dim
EPS = 1e-5                  # LayerNorm eps (PyTorch default)
NEG = -1e30                 # additive attention-mask fill

N = B * S                   # fused batch*seq rows (16)
HN = NHEAD * N              # head-stacked rows (64)
SLAB_W = 128                # lane width of the packed constant slab


# ---- constant-slab layout (static row offsets shared by packer & kernel) ----
def _round8(x):
    return (x + 7) & ~7


def _build_layout():
    off, cur = {}, 0

    def add(name, rows):
        nonlocal cur
        off[name] = cur
        cur = _round8(cur + rows)

    add("emb", VOCAB_PAD)           # [VOCAB_PAD, D]  (pre-scaled by sqrt(D))
    add("pe", N)                    # [N, D]          (pe tiled over batch)
    for l in range(L):
        add(f"wqkv{l}", D)          # [D, 3D]
        add(f"wo{l}", D)            # [D, D]
        add(f"w1{l}", D)            # [D, FF]
        add(f"w2{l}", FF)           # [FF, D]
    add("d1w", D)                   # [D, MLP_H]
    add("d2w", MLP_H)               # [MLP_H, OUT]
    add("hmask", HN)                # [HN, D]   head-lane selection mask
    add("abias", HN)                # [HN, HN]  additive attention mask
    add("regroup", N)               # [N, HN]   head-block -> row regroup
    add("avg", B)                   # [B, N]    mean-over-sequence matrix
    add("vecs", 8 * L + 2)          # small bias / LN-gain rows
    return off, cur


LAYOUT, SLAB_ROWS = _build_layout()

# per-layer vector row indices (within the "vecs" section)
_LN1W, _LN1B, _BQKV, _BO, _LN2W, _LN2B, _F1B, _F2B = range(8)


def _layer_norm(x, w, b):
    # fused single sweep: var = E[x^2] - mu^2 (one cross-lane reduce pass)
    mu = jnp.mean(x, axis=-1, keepdims=True)
    ms = jnp.mean(x * x, axis=-1, keepdims=True)
    var = ms - mu * mu
    return (x - mu) * jax.lax.rsqrt(var + EPS) * w + b


def _softmax(x):
    m = jnp.max(x, axis=-1, keepdims=True)
    e = jnp.exp(x - m)
    s = jnp.sum(e, axis=-1, keepdims=True)
    return e * pl.reciprocal(s, approx=True)   # EUP reciprocal, free slot


def encoder_kernel(ids_ref, slab_ref, out_ref):
    """Whole forward pass on one TensorCore; everything resident in VMEM."""
    inv_sqrt_hd = 1.0 / math.sqrt(HEAD)
    O = LAYOUT

    def mat(name, rows, cols):
        r = O[name]
        return slab_ref[r:r + rows, :cols]

    def vrow(i, width):
        r = O["vecs"] + i
        return slab_ref[r:r + 1, :width]       # [1, width], broadcasts over rows

    # ---- embedding gather (one-hot @ pre-scaled table) + positional enc ----
    ids = ids_ref[...]                                                    # [N,1] i32
    onehot = (jax.lax.broadcasted_iota(jnp.int32, (N, VOCAB_PAD), 1) == ids)
    x = jnp.dot(onehot.astype(jnp.float32), mat("emb", VOCAB_PAD, D),
                preferred_element_type=jnp.float32) + mat("pe", N, D)     # [N, D]

    hmask = mat("hmask", HN, D)       # 1 where lane's head == row block's head
    abias = mat("abias", HN, HN)      # 0 inside (head,batch) blocks, -1e30 else
    regroup = mat("regroup", N, HN)   # sums head blocks back onto N rows

    for l in range(L):                # static unroll over layers
        vb = 8 * l
        ln1w = vrow(vb + _LN1W, D); ln1b = vrow(vb + _LN1B, D)
        bqkv = vrow(vb + _BQKV, 3 * D)
        bo = vrow(vb + _BO, D)
        ln2w = vrow(vb + _LN2W, D); ln2b = vrow(vb + _LN2B, D)
        f1b = vrow(vb + _F1B, FF); f2b = vrow(vb + _F2B, D)

        # ---- self-attention sub-block (norm_first=True) ----
        h1 = _layer_norm(x, ln1w, ln1b)                                   # [N, D]
        qkv = jnp.dot(h1, mat(f"wqkv{l}", D, 3 * D),
                      preferred_element_type=jnp.float32) + bqkv          # [N, 3D]

        # one sublane tile instead of per-head lane-slice concatenates
        qkv4 = jnp.concatenate([qkv] * NHEAD, axis=0)                     # [HN, 3D]
        q4 = qkv4[:, :D] * hmask                                          # [HN, D]
        k4 = qkv4[:, D:2 * D]                                             # [HN, D]
        v4 = qkv4[:, 2 * D:] * hmask                                      # [HN, D]

        # block-diagonal scores for ALL heads/batches in one MXU push;
        # additive mask (applied after the 1/sqrt(hd) scale) kills cross blocks
        scores = jax.lax.dot_general(q4, k4, (((1,), (1,)), ((), ())),
                                     preferred_element_type=jnp.float32)
        scores = scores * inv_sqrt_hd + abias                             # [HN, HN]
        p = _softmax(scores)
        o_blocks = jnp.dot(p, v4, preferred_element_type=jnp.float32)     # [HN, D]
        # regroup head blocks back to [N, D] (head-concat) with one matmul
        o = jnp.dot(regroup, o_blocks, preferred_element_type=jnp.float32)  # [N, D]
        attn = jnp.dot(o, mat(f"wo{l}", D, D),
                       preferred_element_type=jnp.float32) + bo
        x = x + attn

        # ---- feed-forward sub-block (norm_first=True) ----
        h2 = _layer_norm(x, ln2w, ln2b)
        f = jnp.dot(h2, mat(f"w1{l}", D, FF),
                    preferred_element_type=jnp.float32) + f1b             # [N, FF]
        f = jnp.maximum(f, 0.0)                                           # ReLU
        x = x + jnp.dot(f, mat(f"w2{l}", FF, D),
                        preferred_element_type=jnp.float32) + f2b         # [N, D]

    # ---- mean over sequence via precomputed averaging matrix ----
    pool = jnp.dot(mat("avg", B, N), x, preferred_element_type=jnp.float32)  # [B, D]

    # ---- decoder MLP: Linear -> ReLU -> Linear ----
    d1b = vrow(8 * L + 0, MLP_H)
    d2b = vrow(8 * L + 1, OUT)
    m = jnp.maximum(
        jnp.dot(pool, mat("d1w", D, MLP_H),
                preferred_element_type=jnp.float32) + d1b, 0.0)
    out_ref[...] = jnp.dot(m, mat("d2w", MLP_H, OUT),
                           preferred_element_type=jnp.float32) + d2b      # [B, OUT]
    # NOTE: OUT=4 -> one masked final store; accepted at this size.


def make_positional_encoding():
    pos = jnp.arange(MAXLEN, dtype=jnp.float32)[:, None]
    div = jnp.exp(jnp.arange(0, D, 2, dtype=jnp.float32) * (-math.log(10000.0) / D))
    pe = jnp.zeros((MAXLEN, D), dtype=jnp.float32)
    pe = pe.at[:, 0::2].set(jnp.sin(pos * div))
    pe = pe.at[:, 1::2].set(jnp.cos(pos * div))
    return pe


def init_params(key):
    """Deterministic synthetic parameters in PyTorch [out, in] layout."""
    ks = list(jax.random.split(key, 32))
    nk = iter(ks)
    w = lambda shape, s=0.1: (jax.random.normal(next(nk), shape, jnp.float32) * s)
    p = {
        "emb": jax.random.normal(next(nk), (VOCAB, D), jnp.float32) * 0.5,
        # per-layer stacked params
        "in_w":  w((L, 3 * D, D)),      # MultiheadAttention in_proj_weight (q|k|v rows)
        "in_b":  w((L, 3 * D), 0.02),
        "out_w": w((L, D, D)),          # out_proj
        "out_b": w((L, D), 0.02),
        "ln1_w": jnp.ones((L, D), jnp.float32),
        "ln1_b": jnp.zeros((L, D), jnp.float32),
        "ln2_w": jnp.ones((L, D), jnp.float32),
        "ln2_b": jnp.zeros((L, D), jnp.float32),
        "f1_w":  w((L, FF, D)),         # linear1
        "f1_b":  w((L, FF), 0.02),
        "f2_w":  w((L, D, FF)),         # linear2
        "f2_b":  w((L, D), 0.02),
        # decoder MLP
        "d1_w":  w((MLP_H, D)),
        "d1_b":  w((MLP_H,), 0.02),
        "d2_w":  w((OUT, MLP_H)),
        "d2_b":  w((OUT,), 0.02),
    }
    return p


def pack_params(params, pe):
    """One-time host-side packing of everything the kernel needs into a single
    f32 [SLAB_ROWS, 128] slab (single HBM->VMEM DMA). Runs OUTSIDE jit."""
    slab = np.zeros((SLAB_ROWS, SLAB_W), np.float32)
    O = LAYOUT
    t = lambda a: np.asarray(a, np.float32).T

    def put(name, a):
        a = np.asarray(a, np.float32)
        slab[O[name]:O[name] + a.shape[0], :a.shape[1]] = a

    # embedding (sqrt(D) scale folded in) + batch-tiled positional encoding
    put("emb", np.asarray(params["emb"], np.float32) * math.sqrt(D))
    put("pe", np.tile(np.asarray(pe[:S], np.float32), (B, 1)))

    vecs = np.zeros((8 * L + 2, SLAB_W), np.float32)
    for l in range(L):
        put(f"wqkv{l}", t(params["in_w"][l]))     # [D, 3D]  fused q|k|v
        put(f"wo{l}", t(params["out_w"][l]))      # [D, D]
        put(f"w1{l}", t(params["f1_w"][l]))       # [D, FF]
        put(f"w2{l}", t(params["f2_w"][l]))       # [FF, D]
        vb = 8 * l
        vecs[vb + _LN1W, :D] = np.asarray(params["ln1_w"][l])
        vecs[vb + _LN1B, :D] = np.asarray(params["ln1_b"][l])
        vecs[vb + _BQKV, :3 * D] = np.asarray(params["in_b"][l])
        vecs[vb + _BO, :D] = np.asarray(params["out_b"][l])
        vecs[vb + _LN2W, :D] = np.asarray(params["ln2_w"][l])
        vecs[vb + _LN2B, :D] = np.asarray(params["ln2_b"][l])
        vecs[vb + _F1B, :FF] = np.asarray(params["f1_b"][l])
        vecs[vb + _F2B, :D] = np.asarray(params["f2_b"][l])
    put("d1w", t(params["d1_w"]))                 # [D, MLP_H]
    put("d2w", t(params["d2_w"]))                 # [MLP_H, OUT]
    vecs[8 * L + 0, :MLP_H] = np.asarray(params["d1_b"])
    vecs[8 * L + 1, :OUT] = np.asarray(params["d2_b"])
    put("vecs", vecs)

    # head-lane mask: 1 where lane's head == row block's head
    r = np.arange(HN)[:, None]
    c = np.arange(D)[None, :]
    put("hmask", (c // HEAD == r // N).astype(np.float32))
    # additive attention mask: 0 within a (head, batch) block, -1e30 elsewhere
    rr = np.arange(HN)[:, None]
    cc = np.arange(HN)[None, :]
    put("abias", np.where(rr // S == cc // S, 0.0, NEG).astype(np.float32))
    # regroup matrix: sums the NHEAD row blocks back onto N rows
    n = np.arange(N)[:, None]
    rb = np.arange(HN)[None, :]
    put("regroup", (rb % N == n).astype(np.float32))
    # mean-over-sequence pooling matrix
    b = np.arange(B)[:, None]
    nn_ = np.arange(N)[None, :]
    put("avg", np.where(nn_ // S == b, 1.0 / S, 0.0).astype(np.float32))

    return jnp.asarray(slab)


@jax.jit
def mean_transformer_encoder(src, slab):
    """Per-call path: only a token-id reshape + one pallas_call (2 DMAs)."""
    ids = src.reshape(N, 1).astype(jnp.int32)
    vspec = pl.BlockSpec(memory_space=pltpu.MemorySpace.VMEM)
    return pl.pallas_call(
        encoder_kernel,
        out_shape=jax.ShapeDtypeStruct((B, OUT), jnp.float32),
        in_specs=[vspec, vspec],
        out_specs=vspec,
    )(ids, slab)


def reference_forward(src, params, pe):
    """Pure-JAX reference directly from PyTorch-layout params (eval-mode forward)."""
    def ln(x, w, b):
        mu = jnp.mean(x, axis=-1, keepdims=True)
        var = jnp.mean((x - mu) ** 2, axis=-1, keepdims=True)
        return (x - mu) / jnp.sqrt(var + EPS) * w + b

    x = jnp.take(params["emb"], src, axis=0) * math.sqrt(D) + pe[None, :S]   # [B,S,D]
    for l in range(L):
        h = ln(x, params["ln1_w"][l], params["ln1_b"][l])
        qkv = h @ params["in_w"][l].T + params["in_b"][l]
        q, k, v = qkv[..., :D], qkv[..., D:2 * D], qkv[..., 2 * D:]
        qh = q.reshape(B, S, NHEAD, HEAD).transpose(0, 2, 1, 3)
        kh = k.reshape(B, S, NHEAD, HEAD).transpose(0, 2, 1, 3)
        vh = v.reshape(B, S, NHEAD, HEAD).transpose(0, 2, 1, 3)
        sc = jnp.einsum("bhqd,bhkd->bhqk", qh, kh) / math.sqrt(HEAD)
        p = jax.nn.softmax(sc, axis=-1)
        ao = jnp.einsum("bhqk,bhkd->bhqd", p, vh).transpose(0, 2, 1, 3).reshape(B, S, D)
        x = x + (ao @ params["out_w"][l].T + params["out_b"][l])
        h2 = ln(x, params["ln2_w"][l], params["ln2_b"][l])
        f = jnp.maximum(h2 @ params["f1_w"][l].T + params["f1_b"][l], 0.0)
        x = x + (f @ params["f2_w"][l].T + params["f2_b"][l])
    pool = jnp.mean(x, axis=1)
    m = jnp.maximum(pool @ params["d1_w"].T + params["d1_b"], 0.0)
    return m @ params["d2_w"].T + params["d2_b"]


if __name__ == "__main__":
    key = jax.random.PRNGKey(0)
    kp_, ks_ = jax.random.split(key)
    params = init_params(kp_)
    pe = make_positional_encoding()
    src = jax.random.randint(ks_, (B, S), 0, VOCAB, dtype=jnp.int32)

    # one-time packing (outside the jitted per-call path)
    slab = pack_params(params, pe)

    out = jax.block_until_ready(mean_transformer_encoder(src, slab))
    ref = jax.block_until_ready(reference_forward(src, params, pe))

    assert out.shape == (B, OUT)
    assert bool(jnp.all(jnp.isfinite(out)))
    assert bool(jnp.allclose(out, ref, atol=1e-2, rtol=1e-2)), (out, ref)
    print("KERNEL_OK")
</pallas_src>

<mosaic_0001>
module attributes {stable_mosaic.version = 11 : i64} {
  func.func @encoder_kernel(%arg0: memref<16x1xi32, #tpu.memory_space<vmem>>, %arg1: memref<632x128xf32, #tpu.memory_space<vmem>>, %arg2: memref<2x4xf32, #tpu.memory_space<vmem>>) attributes {dimension_semantics = [], scalar_prefetch = 0 : i64, scratch_operands = 0 : i64, tpu.core_type = #tpu.core_type<tc>} {
    %c0 = arith.constant 0 : index
    %c0_0 = arith.constant 0 : index
    %0 = vector.load %arg0[%c0, %c0_0] : memref<16x1xi32, #tpu.memory_space<vmem>>, vector<16x1xi32>
    %1 = tpu.iota {dimensions = array<i32: 1>} : vector<16x56xi32>
    %2 = vector.broadcast %0 : vector<16x1xi32> to vector<16x56xi32>
    %3 = arith.cmpi eq, %1, %2 : vector<16x56xi32>
    %4 = arith.extui %3 : vector<16x56xi1> to vector<16x56xi32>
    %5 = arith.sitofp %4 : vector<16x56xi32> to vector<16x56xf32>
    %c0_1 = arith.constant 0 : index
    %c0_2 = arith.constant 0 : index
    %6 = vector.load %arg1[%c0_1, %c0_2] : memref<632x128xf32, #tpu.memory_space<vmem>>, vector<56x32xf32>
    %cst = arith.constant dense<0.000000e+00> : vector<16x32xf32>
    %7 = tpu.matmul %5, %6, %cst {dimension_numbers = #tpu.dot_dimension_numbers<[1], [0], [0], [1], [0, 0, 1, 1], [], []>} : vector<16x56xf32>, vector<56x32xf32>, vector<16x32xf32> -> vector<16x32xf32>
    %c56 = arith.constant 56 : index
    %c0_3 = arith.constant 0 : index
    %8 = vector.load %arg1[%c56, %c0_3] : memref<632x128xf32, #tpu.memory_space<vmem>>, vector<16x32xf32>
    %9 = arith.addf %7, %8 : vector<16x32xf32>
    %c456 = arith.constant 456 : index
    %c0_4 = arith.constant 0 : index
    %10 = vector.load %arg1[%c456, %c0_4] : memref<632x128xf32, #tpu.memory_space<vmem>>, vector<64x32xf32>
    %c520 = arith.constant 520 : index
    %c0_5 = arith.constant 0 : index
    %11 = vector.load %arg1[%c520, %c0_5] : memref<632x128xf32, #tpu.memory_space<vmem>>, vector<64x64xf32>
    %c584 = arith.constant 584 : index
    %c0_6 = arith.constant 0 : index
    %12 = vector.load %arg1[%c584, %c0_6] : memref<632x128xf32, #tpu.memory_space<vmem>>, vector<16x64xf32>
    %c608 = arith.constant 608 : index
    %c0_7 = arith.constant 0 : index
    %13 = vector.load %arg1[%c608, %c0_7] : memref<632x128xf32, #tpu.memory_space<vmem>>, vector<1x32xf32>
    %c609 = arith.constant 609 : index
    %c0_8 = arith.constant 0 : index
    %14 = vector.load %arg1[%c609, %c0_8] : memref<632x128xf32, #tpu.memory_space<vmem>>, vector<1x32xf32>
    %c610 = arith.constant 610 : index
    %c0_9 = arith.constant 0 : index
    %15 = vector.load %arg1[%c610, %c0_9] : memref<632x128xf32, #tpu.memory_space<vmem>>, vector<1x96xf32>
    %c611 = arith.constant 611 : index
    %c0_10 = arith.constant 0 : index
    %16 = vector.load %arg1[%c611, %c0_10] : memref<632x128xf32, #tpu.memory_space<vmem>>, vector<1x32xf32>
    %c612 = arith.constant 612 : index
    %c0_11 = arith.constant 0 : index
    %17 = vector.load %arg1[%c612, %c0_11] : memref<632x128xf32, #tpu.memory_space<vmem>>, vector<1x32xf32>
    %c613 = arith.constant 613 : index
    %c0_12 = arith.constant 0 : index
    %18 = vector.load %arg1[%c613, %c0_12] : memref<632x128xf32, #tpu.memory_space<vmem>>, vector<1x32xf32>
    %c614 = arith.constant 614 : index
    %c0_13 = arith.constant 0 : index
    %19 = vector.load %arg1[%c614, %c0_13] : memref<632x128xf32, #tpu.memory_space<vmem>>, vector<1x64xf32>
    %c615 = arith.constant 615 : index
    %c0_14 = arith.constant 0 : index
    %20 = vector.load %arg1[%c615, %c0_14] : memref<632x128xf32, #tpu.memory_space<vmem>>, vector<1x32xf32>
    %cst_15 = arith.constant dense<0.000000e+00> : vector<16xf32>
    %21 = vector.multi_reduction <add>, %9, %cst_15 [1] : vector<16x32xf32> to vector<16xf32>
    %22 = vector.shape_cast %21 : vector<16xf32> to vector<16x1xf32>
    %cst_16 = arith.constant 3.200000e+01 : f32
    %23 = vector.broadcast %cst_16 : f32 to vector<16x1xf32>
    %24 = arith.divf %22, %23 : vector<16x1xf32>
    %25 = arith.mulf %9, %9 : vector<16x32xf32>
    %cst_17 = arith.constant dense<0.000000e+00> : vector<16xf32>
    %26 = vector.multi_reduction <add>, %25, %cst_17 [1] : vector<16x32xf32> to vector<16xf32>
    %27 = vector.shape_cast %26 : vector<16xf32> to vector<16x1xf32>
    %cst_18 = arith.constant 3.200000e+01 : f32
    %28 = vector.broadcast %cst_18 : f32 to vector<16x1xf32>
    %29 = arith.divf %27, %28 : vector<16x1xf32>
    %30 = arith.mulf %24, %24 : vector<16x1xf32>
    %31 = arith.subf %29, %30 : vector<16x1xf32>
    %32 = vector.broadcast %24 : vector<16x1xf32> to vector<16x32xf32>
    %33 = arith.subf %9, %32 : vector<16x32xf32>
    %cst_19 = arith.constant 9.99999974E-6 : f32
    %34 = vector.broadcast %cst_19 : f32 to vector<16x1xf32>
    %35 = arith.addf %31, %34 : vector<16x1xf32>
    %36 = math.rsqrt %35 : vector<16x1xf32>
    %37 = vector.broadcast %36 : vector<16x1xf32> to vector<16x32xf32>
    %38 = arith.mulf %33, %37 : vector<16x32xf32>
    %39 = vector.broadcast %13 : vector<1x32xf32> to vector<16x32xf32>
    %40 = arith.mulf %38, %39 : vector<16x32xf32>
    %41 = vector.broadcast %14 : vector<1x32xf32> to vector<16x32xf32>
    %42 = arith.addf %40, %41 : vector<16x32xf32>
    %c72 = arith.constant 72 : index
    %c0_20 = arith.constant 0 : index
    %43 = vector.load %arg1[%c72, %c0_20] : memref<632x128xf32, #tpu.memory_space<vmem>>, vector<32x96xf32>
    %cst_21 = arith.constant dense<0.000000e+00> : vector<16x96xf32>
    %44 = tpu.matmul %42, %43, %cst_21 {dimension_numbers = #tpu.dot_dimension_numbers<[1], [0], [0], [1], [0, 0, 1, 1], [], []>} : vector<16x32xf32>, vector<32x96xf32>, vector<16x96xf32> -> vector<16x96xf32>
    %45 = vector.broadcast %15 : vector<1x96xf32> to vector<16x96xf32>
    %46 = arith.addf %44, %45 : vector<16x96xf32>
    %47 = tpu.concatenate %46, %46, %46, %46 in 0 : vector<16x96xf32>, vector<16x96xf32>, vector<16x96xf32>, vector<16x96xf32> -> vector<64x96xf32>
    %48 = vector.extract_strided_slice %47 {offsets = [0, 0], sizes = [64, 32], strides = [1, 1]} : vector<64x96xf32> to vector<64x32xf32>
    %49 = arith.mulf %48, %10 : vector<64x32xf32>
    %50 = vector.extract_strided_slice %47 {offsets = [0, 32], sizes = [64, 32], strides = [1, 1]} : vector<64x96xf32> to vector<64x32xf32>
    %51 = vector.extract_strided_slice %47 {offsets = [0, 64], sizes = [64, 32], strides = [1, 1]} : vector<64x96xf32> to vector<64x32xf32>
    %52 = arith.mulf %51, %10 : vector<64x32xf32>
    %cst_22 = arith.constant dense<0.000000e+00> : vector<64x64xf32>
    %53 = tpu.matmul %49, %50, %cst_22 {dimension_numbers = #tpu.dot_dimension_numbers<[1], [1], [0], [0], [0, 0, 1, 0], [], []>} : vector<64x32xf32>, vector<64x32xf32>, vector<64x64xf32> -> vector<64x64xf32>
    %cst_23 = arith.constant 0.353553385 : f32
    %54 = vector.broadcast %cst_23 : f32 to vector<64x64xf32>
    %55 = arith.mulf %53, %54 : vector<64x64xf32>
    %56 = arith.addf %55, %11 : vector<64x64xf32>
    %cst_24 = arith.constant dense<0xFF800000> : vector<64xf32>
    %57 = vector.multi_reduction <maximumf>, %56, %cst_24 [1] : vector<64x64xf32> to vector<64xf32>
    %58 = vector.shape_cast %57 : vector<64xf32> to vector<64x1xf32>
    %59 = vector.broadcast %58 : vector<64x1xf32> to vector<64x64xf32>
    %60 = arith.subf %56, %59 : vector<64x64xf32>
    %61 = math.exp %60 : vector<64x64xf32>
    %cst_25 = arith.constant dense<0.000000e+00> : vector<64xf32>
    %62 = vector.multi_reduction <add>, %61, %cst_25 [1] : vector<64x64xf32> to vector<64xf32>
    %63 = vector.shape_cast %62 : vector<64xf32> to vector<64x1xf32>
    %64 = tpu.reciprocal %63 {approx = true} : vector<64x1xf32> -> vector<64x1xf32>
    %65 = vector.broadcast %64 : vector<64x1xf32> to vector<64x64xf32>
    %66 = arith.mulf %61, %65 : vector<64x64xf32>
    %cst_26 = arith.constant dense<0.000000e+00> : vector<64x32xf32>
    %67 = tpu.matmul %66, %52, %cst_26 {dimension_numbers = #tpu.dot_dimension_numbers<[1], [0], [0], [1], [0, 0, 1, 1], [], []>} : vector<64x64xf32>, vector<64x32xf32>, vector<64x32xf32> -> vector<64x32xf32>
    %cst_27 = arith.constant dense<0.000000e+00> : vector<16x32xf32>
    %68 = tpu.matmul %12, %67, %cst_27 {dimension_numbers = #tpu.dot_dimension_numbers<[1], [0], [0], [1], [0, 0, 1, 1], [], []>} : vector<16x64xf32>, vector<64x32xf32>, vector<16x32xf32> -> vector<16x32xf32>
    %c104 = arith.constant 104 : index
    %c0_28 = arith.constant 0 : index
    %69 = vector.load %arg1[%c104, %c0_28] : memref<632x128xf32, #tpu.memory_space<vmem>>, vector<32x32xf32>
    %cst_29 = arith.constant dense<0.000000e+00> : vector<16x32xf32>
    %70 = tpu.matmul %68, %69, %cst_29 {dimension_numbers = #tpu.dot_dimension_numbers<[1], [0], [0], [1], [0, 0, 1, 1], [], []>} : vector<16x32xf32>, vector<32x32xf32>, vector<16x32xf32> -> vector<16x32xf32>
    %71 = vector.broadcast %16 : vector<1x32xf32> to vector<16x32xf32>
    %72 = arith.addf %70, %71 : vector<16x32xf32>
    %73 = arith.addf %9, %72 : vector<16x32xf32>
    %cst_30 = arith.constant dense<0.000000e+00> : vector<16xf32>
    %74 = vector.multi_reduction <add>, %73, %cst_30 [1] : vector<16x32xf32> to vector<16xf32>
    %75 = vector.shape_cast %74 : vector<16xf32> to vector<16x1xf32>
    %cst_31 = arith.constant 3.200000e+01 : f32
    %76 = vector.broadcast %cst_31 : f32 to vector<16x1xf32>
    %77 = arith.divf %75, %76 : vector<16x1xf32>
    %78 = arith.mulf %73, %73 : vector<16x32xf32>
    %cst_32 = arith.constant dense<0.000000e+00> : vector<16xf32>
    %79 = vector.multi_reduction <add>, %78, %cst_32 [1] : vector<16x32xf32> to vector<16xf32>
    %80 = vector.shape_cast %79 : vector<16xf32> to vector<16x1xf32>
    %cst_33 = arith.constant 3.200000e+01 : f32
    %81 = vector.broadcast %cst_33 : f32 to vector<16x1xf32>
    %82 = arith.divf %80, %81 : vector<16x1xf32>
    %83 = arith.mulf %77, %77 : vector<16x1xf32>
    %84 = arith.subf %82, %83 : vector<16x1xf32>
    %85 = vector.broadcast %77 : vector<16x1xf32> to vector<16x32xf32>
    %86 = arith.subf %73, %85 : vector<16x32xf32>
    %cst_34 = arith.constant 9.99999974E-6 : f32
    %87 = vector.broadcast %cst_34 : f32 to vector<16x1xf32>
    %88 = arith.addf %84, %87 : vector<16x1xf32>
    %89 = math.rsqrt %88 : vector<16x1xf32>
    %90 = vector.broadcast %89 : vector<16x1xf32> to vector<16x32xf32>
    %91 = arith.mulf %86, %90 : vector<16x32xf32>
    %92 = vector.broadcast %17 : vector<1x32xf32> to vector<16x32xf32>
    %93 = arith.mulf %91, %92 : vector<16x32xf32>
    %94 = vector.broadcast %18 : vector<1x32xf32> to vector<16x32xf32>
    %95 = arith.addf %93, %94 : vector<16x32xf32>
    %c136 = arith.constant 136 : index
    %c0_35 = arith.constant 0 : index
    %96 = vector.load %arg1[%c136, %c0_35] : memref<632x128xf32, #tpu.memory_space<vmem>>, vector<32x64xf32>
    %cst_36 = arith.constant dense<0.000000e+00> : vector<16x64xf32>
    %97 = tpu.matmul %95, %96, %cst_36 {dimension_numbers = #tpu.dot_dimension_numbers<[1], [0], [0], [1], [0, 0, 1, 1], [], []>} : vector<16x32xf32>, vector<32x64xf32>, vector<16x64xf32> -> vector<16x64xf32>
    %98 = vector.broadcast %19 : vector<1x64xf32> to vector<16x64xf32>
    %99 = arith.addf %97, %98 : vector<16x64xf32>
    %cst_37 = arith.constant 0.000000e+00 : f32
    %100 = vector.broadcast %cst_37 : f32 to vector<16x64xf32>
    %101 = arith.maximumf %99, %100 : vector<16x64xf32>
    %c168 = arith.constant 168 : index
    %c0_38 = arith.constant 0 : index
    %102 = vector.load %arg1[%c168, %c0_38] : memref<632x128xf32, #tpu.memory_space<vmem>>, vector<64x32xf32>
    %cst_39 = arith.constant dense<0.000000e+00> : vector<16x32xf32>
    %103 = tpu.matmul %101, %102, %cst_39 {dimension_numbers = #tpu.dot_dimension_numbers<[1], [0], [0], [1], [0, 0, 1, 1], [], []>} : vector<16x64xf32>, vector<64x32xf32>, vector<16x32xf32> -> vector<16x32xf32>
    %104 = arith.addf %73, %103 : vector<16x32xf32>
    %105 = vector.broadcast %20 : vector<1x32xf32> to vector<16x32xf32>
    %106 = arith.addf %104, %105 : vector<16x32xf32>
    %c616 = arith.constant 616 : index
    %c0_40 = arith.constant 0 : index
    %107 = vector.load %arg1[%c616, %c0_40] : memref<632x128xf32, #tpu.memory_space<vmem>>, vector<1x32xf32>
    %c617 = arith.constant 617 : index
    %c0_41 = arith.constant 0 : index
    %108 = vector.load %arg1[%c617, %c0_41] : memref<632x128xf32, #tpu.memory_space<vmem>>, vector<1x32xf32>
    %c618 = arith.constant 618 : index
    %c0_42 = arith.constant 0 : index
    %109 = vector.load %arg1[%c618, %c0_42] : memref<632x128xf32, #tpu.memory_space<vmem>>, vector<1x96xf32>
    %c619 = arith.constant 619 : index
    %c0_43 = arith.constant 0 : index
    %110 = vector.load %arg1[%c619, %c0_43] : memref<632x128xf32, #tpu.memory_space<vmem>>, vector<1x32xf32>
    %c620 = arith.constant 620 : index
    %c0_44 = arith.constant 0 : index
    %111 = vector.load %arg1[%c620, %c0_44] : memref<632x128xf32, #tpu.memory_space<vmem>>, vector<1x32xf32>
    %c621 = arith.constant 621 : index
    %c0_45 = arith.constant 0 : index
    %112 = vector.load %arg1[%c621, %c0_45] : memref<632x128xf32, #tpu.memory_space<vmem>>, vector<1x32xf32>
    %c622 = arith.constant 622 : index
    %c0_46 = arith.constant 0 : index
    %113 = vector.load %arg1[%c622, %c0_46] : memref<632x128xf32, #tpu.memory_space<vmem>>, vector<1x64xf32>
    %c623 = arith.constant 623 : index
    %c0_47 = arith.constant 0 : index
    %114 = vector.load %arg1[%c623, %c0_47] : memref<632x128xf32, #tpu.memory_space<vmem>>, vector<1x32xf32>
    %cst_48 = arith.constant dense<0.000000e+00> : vector<16xf32>
    %115 = vector.multi_reduction <add>, %106, %cst_48 [1] : vector<16x32xf32> to vector<16xf32>
    %116 = vector.shape_cast %115 : vector<16xf32> to vector<16x1xf32>
    %cst_49 = arith.constant 3.200000e+01 : f32
    %117 = vector.broadcast %cst_49 : f32 to vector<16x1xf32>
    %118 = arith.divf %116, %117 : vector<16x1xf32>
    %119 = arith.mulf %106, %106 : vector<16x32xf32>
    %cst_50 = arith.constant dense<0.000000e+00> : vector<16xf32>
    %120 = vector.multi_reduction <add>, %119, %cst_50 [1] : vector<16x32xf32> to vector<16xf32>
    %121 = vector.shape_cast %120 : vector<16xf32> to vector<16x1xf32>
    %cst_51 = arith.constant 3.200000e+01 : f32
    %122 = vector.broadcast %cst_51 : f32 to vector<16x1xf32>
    %123 = arith.divf %121, %122 : vector<16x1xf32>
    %124 = arith.mulf %118, %118 : vector<16x1xf32>
    %125 = arith.subf %123, %124 : vector<16x1xf32>
    %126 = vector.broadcast %118 : vector<16x1xf32> to vector<16x32xf32>
    %127 = arith.subf %106, %126 : vector<16x32xf32>
    %cst_52 = arith.constant 9.99999974E-6 : f32
    %128 = vector.broadcast %cst_52 : f32 to vector<16x1xf32>
    %129 = arith.addf %125, %128 : vector<16x1xf32>
    %130 = math.rsqrt %129 : vector<16x1xf32>
    %131 = vector.broadcast %130 : vector<16x1xf32> to vector<16x32xf32>
    %132 = arith.mulf %127, %131 : vector<16x32xf32>
    %133 = vector.broadcast %107 : vector<1x32xf32> to vector<16x32xf32>
    %134 = arith.mulf %132, %133 : vector<16x32xf32>
    %135 = vector.broadcast %108 : vector<1x32xf32> to vector<16x32xf32>
    %136 = arith.addf %134, %135 : vector<16x32xf32>
    %c232 = arith.constant 232 : index
    %c0_53 = arith.constant 0 : index
    %137 = vector.load %arg1[%c232, %c0_53] : memref<632x128xf32, #tpu.memory_space<vmem>>, vector<32x96xf32>
    %cst_54 = arith.constant dense<0.000000e+00> : vector<16x96xf32>
    %138 = tpu.matmul %136, %137, %cst_54 {dimension_numbers = #tpu.dot_dimension_numbers<[1], [0], [0], [1], [0, 0, 1, 1], [], []>} : vector<16x32xf32>, vector<32x96xf32>, vector<16x96xf32> -> vector<16x96xf32>
    %139 = vector.broadcast %109 : vector<1x96xf32> to vector<16x96xf32>
    %140 = arith.addf %138, %139 : vector<16x96xf32>
    %141 = tpu.concatenate %140, %140, %140, %140 in 0 : vector<16x96xf32>, vector<16x96xf32>, vector<16x96xf32>, vector<16x96xf32> -> vector<64x96xf32>
    %142 = vector.extract_strided_slice %141 {offsets = [0, 0], sizes = [64, 32], strides = [1, 1]} : vector<64x96xf32> to vector<64x32xf32>
    %143 = arith.mulf %142, %10 : vector<64x32xf32>
    %144 = vector.extract_strided_slice %141 {offsets = [0, 32], sizes = [64, 32], strides = [1, 1]} : vector<64x96xf32> to vector<64x32xf32>
    %145 = vector.extract_strided_slice %141 {offsets = [0, 64], sizes = [64, 32], strides = [1, 1]} : vector<64x96xf32> to vector<64x32xf32>
    %146 = arith.mulf %145, %10 : vector<64x32xf32>
    %cst_55 = arith.constant dense<0.000000e+00> : vector<64x64xf32>
    %147 = tpu.matmul %143, %144, %cst_55 {dimension_numbers = #tpu.dot_dimension_numbers<[1], [1], [0], [0], [0, 0, 1, 0], [], []>} : vector<64x32xf32>, vector<64x32xf32>, vector<64x64xf32> -> vector<64x64xf32>
    %cst_56 = arith.constant 0.353553385 : f32
    %148 = vector.broadcast %cst_56 : f32 to vector<64x64xf32>
    %149 = arith.mulf %147, %148 : vector<64x64xf32>
    %150 = arith.addf %149, %11 : vector<64x64xf32>
    %cst_57 = arith.constant dense<0xFF800000> : vector<64xf32>
    %151 = vector.multi_reduction <maximumf>, %150, %cst_57 [1] : vector<64x64xf32> to vector<64xf32>
    %152 = vector.shape_cast %151 : vector<64xf32> to vector<64x1xf32>
    %153 = vector.broadcast %152 : vector<64x1xf32> to vector<64x64xf32>
    %154 = arith.subf %150, %153 : vector<64x64xf32>
    %155 = math.exp %154 : vector<64x64xf32>
    %cst_58 = arith.constant dense<0.000000e+00> : vector<64xf32>
    %156 = vector.multi_reduction <add>, %155, %cst_58 [1] : vector<64x64xf32> to vector<64xf32>
    %157 = vector.shape_cast %156 : vector<64xf32> to vector<64x1xf32>
    %158 = tpu.reciprocal %157 {approx = true} : vector<64x1xf32> -> vector<64x1xf32>
    %159 = vector.broadcast %158 : vector<64x1xf32> to vector<64x64xf32>
    %160 = arith.mulf %155, %159 : vector<64x64xf32>
    %cst_59 = arith.constant dense<0.000000e+00> : vector<64x32xf32>
    %161 = tpu.matmul %160, %146, %cst_59 {dimension_numbers = #tpu.dot_dimension_numbers<[1], [0], [0], [1], [0, 0, 1, 1], [], []>} : vector<64x64xf32>, vector<64x32xf32>, vector<64x32xf32> -> vector<64x32xf32>
    %cst_60 = arith.constant dense<0.000000e+00> : vector<16x32xf32>
    %162 = tpu.matmul %12, %161, %cst_60 {dimension_numbers = #tpu.dot_dimension_numbers<[1], [0], [0], [1], [0, 0, 1, 1], [], []>} : vector<16x64xf32>, vector<64x32xf32>, vector<16x32xf32> -> vector<16x32xf32>
    %c264 = arith.constant 264 : index
    %c0_61 = arith.constant 0 : index
    %163 = vector.load %arg1[%c264, %c0_61] : memref<632x128xf32, #tpu.memory_space<vmem>>, vector<32x32xf32>
    %cst_62 = arith.constant dense<0.000000e+00> : vector<16x32xf32>
    %164 = tpu.matmul %162, %163, %cst_62 {dimension_numbers = #tpu.dot_dimension_numbers<[1], [0], [0], [1], [0, 0, 1, 1], [], []>} : vector<16x32xf32>, vector<32x32xf32>, vector<16x32xf32> -> vector<16x32xf32>
    %165 = vector.broadcast %110 : vector<1x32xf32> to vector<16x32xf32>
    %166 = arith.addf %164, %165 : vector<16x32xf32>
    %167 = arith.addf %106, %166 : vector<16x32xf32>
    %cst_63 = arith.constant dense<0.000000e+00> : vector<16xf32>
    %168 = vector.multi_reduction <add>, %167, %cst_63 [1] : vector<16x32xf32> to vector<16xf32>
    %169 = vector.shape_cast %168 : vector<16xf32> to vector<16x1xf32>
    %cst_64 = arith.constant 3.200000e+01 : f32
    %170 = vector.broadcast %cst_64 : f32 to vector<16x1xf32>
    %171 = arith.divf %169, %170 : vector<16x1xf32>
    %172 = arith.mulf %167, %167 : vector<16x32xf32>
    %cst_65 = arith.constant dense<0.000000e+00> : vector<16xf32>
    %173 = vector.multi_reduction <add>, %172, %cst_65 [1] : vector<16x32xf32> to vector<16xf32>
    %174 = vector.shape_cast %173 : vector<16xf32> to vector<16x1xf32>
    %cst_66 = arith.constant 3.200000e+01 : f32
    %175 = vector.broadcast %cst_66 : f32 to vector<16x1xf32>
    %176 = arith.divf %174, %175 : vector<16x1xf32>
    %177 = arith.mulf %171, %171 : vector<16x1xf32>
    %178 = arith.subf %176, %177 : vector<16x1xf32>
    %179 = vector.broadcast %171 : vector<16x1xf32> to vector<16x32xf32>
    %180 = arith.subf %167, %179 : vector<16x32xf32>
    %cst_67 = arith.constant 9.99999974E-6 : f32
    %181 = vector.broadcast %cst_67 : f32 to vector<16x1xf32>
    %182 = arith.addf %178, %181 : vector<16x1xf32>
    %183 = math.rsqrt %182 : vector<16x1xf32>
    %184 = vector.broadcast %183 : vector<16x1xf32> to vector<16x32xf32>
    %185 = arith.mulf %180, %184 : vector<16x32xf32>
    %186 = vector.broadcast %111 : vector<1x32xf32> to vector<16x32xf32>
    %187 = arith.mulf %185, %186 : vector<16x32xf32>
    %188 = vector.broadcast %112 : vector<1x32xf32> to vector<16x32xf32>
    %189 = arith.addf %187, %188 : vector<16x32xf32>
    %c296 = arith.constant 296 : index
    %c0_68 = arith.constant 0 : index
    %190 = vector.load %arg1[%c296, %c0_68] : memref<632x128xf32, #tpu.memory_space<vmem>>, vector<32x64xf32>
    %cst_69 = arith.constant dense<0.000000e+00> : vector<16x64xf32>
    %191 = tpu.matmul %189, %190, %cst_69 {dimension_numbers = #tpu.dot_dimension_numbers<[1], [0], [0], [1], [0, 0, 1, 1], [], []>} : vector<16x32xf32>, vector<32x64xf32>, vector<16x64xf32> -> vector<16x64xf32>
    %192 = vector.broadcast %113 : vector<1x64xf32> to vector<16x64xf32>
    %193 = arith.addf %191, %192 : vector<16x64xf32>
    %cst_70 = arith.constant 0.000000e+00 : f32
    %194 = vector.broadcast %cst_70 : f32 to vector<16x64xf32>
    %195 = arith.maximumf %193, %194 : vector<16x64xf32>
    %c328 = arith.constant 328 : index
    %c0_71 = arith.constant 0 : index
    %196 = vector.load %arg1[%c328, %c0_71] : memref<632x128xf32, #tpu.memory_space<vmem>>, vector<64x32xf32>
    %cst_72 = arith.constant dense<0.000000e+00> : vector<16x32xf32>
    %197 = tpu.matmul %195, %196, %cst_72 {dimension_numbers = #tpu.dot_dimension_numbers<[1], [0], [0], [1], [0, 0, 1, 1], [], []>} : vector<16x64xf32>, vector<64x32xf32>, vector<16x32xf32> -> vector<16x32xf32>
    %198 = arith.addf %167, %197 : vector<16x32xf32>
    %199 = vector.broadcast %114 : vector<1x32xf32> to vector<16x32xf32>
    %200 = arith.addf %198, %199 : vector<16x32xf32>
    %c600 = arith.constant 600 : index
    %c0_73 = arith.constant 0 : index
    %201 = vector.load %arg1[%c600, %c0_73] : memref<632x128xf32, #tpu.memory_space<vmem>>, vector<2x16xf32>
    %cst_74 = arith.constant dense<0.000000e+00> : vector<2x32xf32>
    %202 = tpu.matmul %201, %200, %cst_74 {dimension_numbers = #tpu.dot_dimension_numbers<[1], [0], [0], [1], [0, 0, 1, 1], [], []>} : vector<2x16xf32>, vector<16x32xf32>, vector<2x32xf32> -> vector<2x32xf32>
    %c624 = arith.constant 624 : index
    %c0_75 = arith.constant 0 : index
    %203 = vector.load %arg1[%c624, %c0_75] : memref<632x128xf32, #tpu.memory_space<vmem>>, vector<1x32xf32>
    %c625 = arith.constant 625 : index
    %c0_76 = arith.constant 0 : index
    %204 = vector.load %arg1[%c625, %c0_76] : memref<632x128xf32, #tpu.memory_space<vmem>>, vector<1x4xf32>
    %c392 = arith.constant 392 : index
    %c0_77 = arith.constant 0 : index
    %205 = vector.load %arg1[%c392, %c0_77] : memref<632x128xf32, #tpu.memory_space<vmem>>, vector<32x32xf32>
    %cst_78 = arith.constant dense<0.000000e+00> : vector<2x32xf32>
    %206 = tpu.matmul %202, %205, %cst_78 {dimension_numbers = #tpu.dot_dimension_numbers<[1], [0], [0], [1], [0, 0, 1, 1], [], []>} : vector<2x32xf32>, vector<32x32xf32>, vector<2x32xf32> -> vector<2x32xf32>
    %207 = vector.broadcast %203 : vector<1x32xf32> to vector<2x32xf32>
    %208 = arith.addf %206, %207 : vector<2x32xf32>
    %cst_79 = arith.constant 0.000000e+00 : f32
    %209 = vector.broadcast %cst_79 : f32 to vector<2x32xf32>
    %210 = arith.maximumf %208, %209 : vector<2x32xf32>
    %c424 = arith.constant 424 : index
    %c0_80 = arith.constant 0 : index
    %211 = vector.load %arg1[%c424, %c0_80] : memref<632x128xf32, #tpu.memory_space<vmem>>, vector<32x4xf32>
    %cst_81 = arith.constant dense<0.000000e+00> : vector<2x4xf32>
    %212 = tpu.matmul %210, %211, %cst_81 {dimension_numbers = #tpu.dot_dimension_numbers<[1], [0], [0], [1], [0, 0, 1, 1], [], []>} : vector<2x32xf32>, vector<32x4xf32>, vector<2x4xf32> -> vector<2x4xf32>
    %213 = vector.broadcast %204 : vector<1x4xf32> to vector<2x4xf32>
    %214 = arith.addf %212, %213 : vector<2x4xf32>
    %c0_82 = arith.constant 0 : index
    %c0_83 = arith.constant 0 : index
    %215 = vector.load %arg2[%c0_82, %c0_83] : memref<2x4xf32, #tpu.memory_space<vmem>>, vector<2x4xf32>
    tpu.vector_store %arg2[%c0_82, %c0_83], %214 {strides = array<i32>} : memref<2x4xf32, #tpu.memory_space<vmem>>, vector<2x4xf32>,
    return
  }
}

</mosaic_0001>

<llo_original>
// kernel: mean_transformer_encoder.1
$region0: #{mean_transformer_encoder.1}
  #allocation0 [shape = 'u32[]', space=smem, size = 0x4, offset = 0x4, fixed_abs, tag = 'smem constant byte address 0x4 - core index']
  #allocation1 [shape = 'u32[144,128]{1,0:T(1,128)}', space=vmem, size = 0x12000, scoped, tag = 'internal scratch']
  %s0 = inlined_call_operand.vmem [shape: s32[16,1], index: 0, kind: input, shape index: {}]
  %s1 = inlined_call_operand.hbm [shape: f32[632,128], index: 1, kind: input, shape index: {}]
  %s2 = inlined_call_operand.hbm [shape: f32[2,4], index: 2, kind: output, shape index: {}]
  %s3 = sld [smem:[#allocation0]]
  $region22: #{mean_transformer_encoder.1} parent=0
    _
  %s5 = ssub.s32 1, %s3
  %s6 = scalar_select 0, %s5, %s3
  $region1: #{mean_transformer_encoder.1} parent=0
    #allocation2 [shape = 'u8[323584]{0}', space=vmem, size = 0x4f000, scoped, tag = 'input window, operand 1, single buffered']
    #allocation3 [shape = 's32[1]{0}', space=sflag, size = 0x4, scoped, tag = 'scoped memory for mean_transformer_encoder.1']
    #allocation4 [shape = 's32[1]{0}', space=sflag, size = 0x4, scoped, tag = 'scoped memory for mean_transformer_encoder.1']
    #allocation5 [shape = 'u8[1024]{0}', space=vmem, size = 0x400, scoped, tag = 'output window, operand 0, single buffered']
    %7 = vsyncpa [#allocation3], 0
    %8 = vsyncpa [#allocation4], 0
    // Predicated region
    $region2: #{mean_transformer_encoder.1} parent=1 // pred_check
      _
    $region3: #{mean_transformer_encoder.1} parent=1 // pred_check_branch
      %10 = sbr.rel (0) target = $region5
    $region4: #{mean_transformer_encoder.1} parent=1 // pred_region
      _
    $region5: #{mean_transformer_encoder.1} parent=1 // pred_fallthru
      _
    // Predicated region
    $region6: #{mean_transformer_encoder.1} parent=1 // pred_check
      _
    $region7: #{mean_transformer_encoder.1} parent=1 // pred_check_branch
      %12 = sbr.rel (0) target = $region9
    $region8: #{mean_transformer_encoder.1} parent=1 // pred_region
      %s14 = ssub.s32 10112, 10112
      %15 = vsyncadd [#allocation3], %s14
      %s16 = sshll.u32 [#allocation2], 4
      %s17 = int_to_ptr.vmem [resolvable:$true] %s16
      %22 = dma.hbm_to_vmem [thread:$0]  %s1, 10112, %s17, [#allocation3], 128, 128, 8
    $region9: #{mean_transformer_encoder.1} parent=1 // pred_fallthru
      _
    // Predicated region
    $region10: #{mean_transformer_encoder.1} parent=1 // pred_check
      _
    $region11: #{mean_transformer_encoder.1} parent=1 // pred_check_branch
      %24 = sbr.rel (0) target = $region13
    $region12: #{mean_transformer_encoder.1} parent=1 // pred_region
      %25 = dma.done [#allocation3], 10112
    $region13: #{mean_transformer_encoder.1} parent=1 // pred_fallthru
      _
    %v26 = vld [vmem:[%s0] sm:$0xff]
    %v27 = vld [vmem:[%s0 + $0x8] sm:$0xff]
    %v28 = vlaneseq
    %v29 = vand.u32 %v28, 127
    %30 = vset.pattern.permute.xlu0 0
    %31 = vperm.xlu0 %30, %v26
    %v32 = vpop.permute.xlu0 %31
    %33 = vset.pattern.permute.xlu0 0
    %34 = vperm.xlu0 %33, %v27
    %v35 = vpop.permute.xlu0 %34
    %vm36 = vcmp.eq.s32.totalorder %v29, %v32
    %vm37 = vcmp.eq.s32.totalorder %v29, %v35
    %v38 = vsel %vm36, 1, 0
    %v39 = vsel %vm37, 1, 0
    %v40 = vcvt.s32.f32 %v38
    %v41 = vcvt.s32.f32 %v39
    %v42 = vld [vmem:[#allocation2] sm:$0xff]
    %v43 = vld [vmem:[#allocation2 + $0x8] sm:$0xff]
    %v44 = vld [vmem:[#allocation2 + $0x10] sm:$0xff]
    %v45 = vld [vmem:[#allocation2 + $0x18] sm:$0xff]
    %v46 = vld [vmem:[#allocation2 + $0x20] sm:$0xff]
    %v47 = vld [vmem:[#allocation2 + $0x28] sm:$0xff]
    %v48 = vld [vmem:[#allocation2 + $0x30] sm:$0xff]
    %v49 = vld [vmem:[#allocation2 + $0x38] sm:$0xff]
    %v50 = vld [vmem:[#allocation2 + $0x40] sm:$0xff]
    %vm51 = vcmask 457728
    %v53 = vsel %vm51, %v40, 0
    %v56 = vsel %vm51, %v41, 0
    %58 = vmatprep.subr.mxu0 0.0
    %59 = vmatpush1.msra.mxu0 %v42
    %60 = vmatprep.subr.mxu0 0.0
    %61 = vmatpush1.msra.mxu0 %v43
    %62 = vmatprep.subr.mxu0 0.0
    %63 = vmatpush1.msra.mxu0 %v44
    %64 = vmatprep.subr.mxu0 0.0
    %65 = vmatpush1.msra.mxu0 %v45
    %66 = vmatprep.subr.mxu0 0.0
    %67 = vmatpush1.msra.mxu0 %v46
    %68 = vmatprep.subr.mxu0 0.0
    %69 = vmatpush1.msra.mxu0 %v47
    %70 = vmatprep.subr.mxu0 0.0
    %71 = vmatpush1.msra.mxu0 %v48
    %72 = vmatprep.subr.mxu0 0.0
    %73 = vmatpush1.msra.mxu0 0.0
    %74 = vmatprep.subr.mxu0 0.0
    %75 = vmatpush1.msra.mxu0 0.0
    %76 = vmatprep.subr.mxu0 0.0
    %77 = vmatpush1.msra.mxu0 0.0
    %78 = vmatprep.subr.mxu0 0.0
    %79 = vmatpush1.msra.mxu0 0.0
    %80 = vmatprep.subr.mxu0 0.0
    %81 = vmatpush1.msra.mxu0 0.0
    %82 = vmatprep.subr.mxu0 0.0
    %83 = vmatpush1.msra.mxu0 0.0
    %84 = vmatprep.subr.mxu0 0.0
    %85 = vmatpush1.msra.mxu0 0.0
    %86 = vmatprep.subr.mxu0 0.0
    %87 = vmatpush1.msra.mxu0 0.0
    %88 = vmatprep.subr.mxu0 0.0
    %89 = vmatpush1.msra.mxu0 0.0
    %90 = vmatprep.subr.mxu0 0.0
    %91 = vmatpush1.msra.mxu0 0.0
    %92 = vmatprep.subr.mxu0 0.0
    %93 = vmatpush1.msra.mxu0 0.0
    %94 = vmatprep.subr.mxu0 0.0
    %95 = vmatpush1.msra.mxu0 0.0
    %96 = vmatprep.subr.mxu0 0.0
    %97 = vmatpush1.msra.mxu0 0.0
    %98 = vmatprep.subr.mxu0 0.0
    %99 = vmatpush1.msra.mxu0 0.0
    %100 = vmatprep.subr.mxu0 0.0
    %101 = vmatpush1.msra.mxu0 0.0
    %102 = vmatprep.subr.mxu0 0.0
    %103 = vmatpush1.msra.mxu0 0.0
    %104 = vmatprep.subr.mxu0 0.0
    %105 = vmatpush1.msra.mxu0 0.0
    %106 = vmatprep.subr.mxu0 0.0
    %107 = vmatpush1.msra.mxu0 0.0
    %108 = vmatprep.subr.mxu0 0.0
    %109 = vmatpush1.msra.mxu0 0.0
    %110 = vmatprep.subr.mxu0 0.0
    %111 = vmatpush1.msra.mxu0 0.0
    %112 = vmatprep.subr.mxu0 0.0
    %113 = vmatpush1.msra.mxu0 0.0
    %114 = vmatprep.subr.mxu0 0.0
    %115 = vmatpush1.msra.mxu0 0.0
    %116 = vmatprep.subr.mxu0 0.0
    %117 = vmatpush1.msra.mxu0 0.0
    %118 = vmatprep.subr.mxu0 0.0
    %119 = vmatpush1.msra.mxu0 0.0
    %120 = vmatprep.subr.mxu0 0.0
    %121 = vmatpush1.msra.mxu0 0.0
    %122 = vmatprep.mubr.f32.mxu0 0.0
    %123 = vmatmul.mubr.f32.gmra.mrb[0].mxu0 %v53
    %v124 = vpop.f32.mrb[0].mxu0
    %v125 = vadd.f32 %v49, %v124
    %v126 = vpop.f32.mrb[0].mxu0
    %127 = vmatprep.mubr.f32.mxu0 0.0
    %128 = vmatmul.mubr.f32.gmra.mrb[0].mxu0 %v56
    %v129 = vpop.f32.mrb[0].mxu0
    %v130 = vadd.f32 %v50, %v129
    %v131 = vpop.f32.mrb[0].mxu0
    %132 = vdwg.mxu0
    %v133 = vld [vmem:[#allocation2 + $0x1c8] sm:$0xff]
    %v134 = vld [vmem:[#allocation2 + $0x1d0] sm:$0xff]
    %v135 = vld [vmem:[#allocation2 + $0x1d8] sm:$0xff]
    %v136 = vld [vmem:[#allocation2 + $0x1e0] sm:$0xff]
    %v137 = vld [vmem:[#allocation2 + $0x1e8] sm:$0xff]
    %v138 = vld [vmem:[#allocation2 + $0x1f0] sm:$0xff]
    %v139 = vld [vmem:[#allocation2 + $0x1f8] sm:$0xff]
    %v140 = vld [vmem:[#allocation2 + $0x200] sm:$0xff]
    %v141 = vld [vmem:[#allocation2 + $0x208] sm:$0xff]
    %v142 = vld [vmem:[#allocation2 + $0x210] sm:$0xff]
    %v143 = vld [vmem:[#allocation2 + $0x218] sm:$0xff]
    %v144 = vld [vmem:[#allocation2 + $0x220] sm:$0xff]
    %v145 = vld [vmem:[#allocation2 + $0x228] sm:$0xff]
    %v146 = vld [vmem:[#allocation2 + $0x230] sm:$0xff]
    %v147 = vld [vmem:[#allocation2 + $0x238] sm:$0xff]
    %v148 = vld [vmem:[#allocation2 + $0x240] sm:$0xff]
    %v149 = vld [vmem:[#allocation2 + $0x248] sm:$0xff]
    %v150 = vld [vmem:[#allocation2 + $0x250] sm:$0xff]
    %v151 = vld [vmem:[#allocation2 + $0x260] sm:$0x1]
    %v152 = vld [vmem:[#allocation2 + $0x261] sm:$0x1]
    %v153 = vld [vmem:[#allocation2 + $0x262] sm:$0x1]
    %v154 = vld [vmem:[#allocation2 + $0x263] sm:$0x1]
    %v155 = vld [vmem:[#allocation2 + $0x264] sm:$0x1]
    %v156 = vld [vmem:[#allocation2 + $0x265] sm:$0x1]
    %v157 = vld [vmem:[#allocation2 + $0x266] sm:$0x1]
    %v158 = vld [vmem:[#allocation2 + $0x267] sm:$0x1]
    %vm159 = vcmask 261120
    %v160 = vsel %vm159, %v125, 0.0
    %161 = vadd.xlane.f32.xlu0 %v160
    %v162 = vpop.xlane.xlu0 %161
    %v163 = vsel %vm159, %v130, 0.0
    %164 = vadd.xlane.f32.xlu0 %v163
    %v165 = vpop.xlane.xlu0 %164
    %v166 = vrcp.pop 32.0
    %v167 = vmul.f32 %v162, %v166
    %v168 = vmul.f32 %v165, %v166
    %v169 = vmul.f32 %v125, %v125
    %v170 = vmul.f32 %v130, %v130
    %v171 = vsel %vm159, %v169, 0.0
    %172 = vadd.xlane.f32.xlu0 %v171
    %v173 = vpop.xlane.xlu0 %172
    %v174 = vsel %vm159, %v170, 0.0
    %175 = vadd.xlane.f32.xlu0 %v174
    %v176 = vpop.xlane.xlu0 %175
    %v177 = vmul.f32 %v173, %v166
    %v178 = vmul.f32 %v176, %v166
    %v179 = vmul.f32 %v167, %v167
    %v180 = vmul.f32 %v168, %v168
    %v181 = vsub.f32 %v177, %v179
    %v182 = vsub.f32 %v178, %v180
    %v183 = vsub.f32 %v125, %v167
    %v184 = vsub.f32 %v130, %v168
    %v185 = vadd.f32 %v181, 1e-05
    %v186 = vadd.f32 %v182, 1e-05
    %v187 = vrsqrt.pop %v185
    %v188 = vrsqrt.pop %v186
    %v189 = vmul.f32 %v183, %v187
    %v190 = vmul.f32 %v184, %v188
    %v191 = vlaneseq
    %v192 = vshrl.u32 %v191, 7
    %v193 = vsub.s32 0, %v192
    %v194 = vrot.slane %v151, %v193
    %v195 = vmul.f32 %v189, %v194
    %v196 = vmul.f32 %v190, %v194
    %v197 = vlaneseq
    %v198 = vshrl.u32 %v197, 7
    %v199 = vsub.s32 0, %v198
    %v200 = vrot.slane %v152, %v199
    %v201 = vadd.f32 %v195, %v200
    %v202 = vadd.f32 %v196, %v200
    %v203 = vld [vmem:[#allocation2 + $0x48] sm:$0xff]
    %v204 = vld [vmem:[#allocation2 + $0x50] sm:$0xff]
    %v205 = vld [vmem:[#allocation2 + $0x58] sm:$0xff]
    %v206 = vld [vmem:[#allocation2 + $0x60] sm:$0xff]
    %v207 = vlaneseq
    %v208 = vshrl.u32 %v207, 7
    %v209 = vsub.s32 0, %v208
    %v210 = vrot.slane %v153, %v209
    %v212 = vsel %vm159, %v201, 0
    %v215 = vsel %vm159, %v202, 0
    %217 = vmatprep.subr.mxu0 0.0
    %218 = vmatpush1.msra.mxu0 %v203
    %219 = vmatprep.subr.mxu0 0.0
    %220 = vmatpush1.msra.mxu0 %v204
    %221 = vmatprep.subr.mxu0 0.0
    %222 = vmatpush1.msra.mxu0 %v205
    %223 = vmatprep.subr.mxu0 0.0
    %224 = vmatpush1.msra.mxu0 %v206
    %225 = vmatprep.subr.mxu0 0.0
    %226 = vmatpush1.msra.mxu0 0.0
    %227 = vmatprep.subr.mxu0 0.0
    %228 = vmatpush1.msra.mxu0 0.0
    %229 = vmatprep.subr.mxu0 0.0
    %230 = vmatpush1.msra.mxu0 0.0
    %231 = vmatprep.subr.mxu0 0.0
    %232 = vmatpush1.msra.mxu0 0.0
    %233 = vmatprep.subr.mxu0 0.0
    %234 = vmatpush1.msra.mxu0 0.0
    %235 = vmatprep.subr.mxu0 0.0
    %236 = vmatpush1.msra.mxu0 0.0
    %237 = vmatprep.subr.mxu0 0.0
    %238 = vmatpush1.msra.mxu0 0.0
    %239 = vmatprep.subr.mxu0 0.0
    %240 = vmatpush1.msra.mxu0 0.0
    %241 = vmatprep.subr.mxu0 0.0
    %242 = vmatpush1.msra.mxu0 0.0
    %243 = vmatprep.subr.mxu0 0.0
    %244 = vmatpush1.msra.mxu0 0.0
    %245 = vmatprep.subr.mxu0 0.0
    %246 = vmatpush1.msra.mxu0 0.0
    %247 = vmatprep.subr.mxu0 0.0
    %248 = vmatpush1.msra.mxu0 0.0
    %249 = vmatprep.subr.mxu0 0.0
    %250 = vmatpush1.msra.mxu0 0.0
    %251 = vmatprep.subr.mxu0 0.0
    %252 = vmatpush1.msra.mxu0 0.0
    %253 = vmatprep.subr.mxu0 0.0
    %254 = vmatpush1.msra.mxu0 0.0
    %255 = vmatprep.subr.mxu0 0.0
    %256 = vmatpush1.msra.mxu0 0.0
    %257 = vmatprep.subr.mxu0 0.0
    %258 = vmatpush1.msra.mxu0 0.0
    %259 = vmatprep.subr.mxu0 0.0
    %260 = vmatpush1.msra.mxu0 0.0
    %261 = vmatprep.subr.mxu0 0.0
    %262 = vmatpush1.msra.mxu0 0.0
    %263 = vmatprep.subr.mxu0 0.0
    %264 = vmatpush1.msra.mxu0 0.0
    %265 = vmatprep.subr.mxu0 0.0
    %266 = vmatpush1.msra.mxu0 0.0
    %267 = vmatprep.subr.mxu0 0.0
    %268 = vmatpush1.msra.mxu0 0.0
    %269 = vmatprep.subr.mxu0 0.0
    %270 = vmatpush1.msra.mxu0 0.0
    %271 = vmatprep.subr.mxu0 0.0
    %272 = vmatpush1.msra.mxu0 0.0
    %273 = vmatprep.subr.mxu0 0.0
    %274 = vmatpush1.msra.mxu0 0.0
    %275 = vmatprep.subr.mxu0 0.0
    %276 = vmatpush1.msra.mxu0 0.0
    %277 = vmatprep.subr.mxu0 0.0
    %278 = vmatpush1.msra.mxu0 0.0
    %279 = vmatprep.subr.mxu0 0.0
    %280 = vmatpush1.msra.mxu0 0.0
    %281 = vmatprep.mubr.f32.mxu0 0.0
    %282 = vmatmul.mubr.f32.gmra.mrb[0].mxu0 %v212
    %v283 = vpop.f32.mrb[0].mxu0
    %v284 = vadd.f32 %v210, %v283
    %v285 = vpop.f32.mrb[0].mxu0
    %286 = vmatprep.mubr.f32.mxu0 0.0
    %287 = vmatmul.mubr.f32.gmra.mrb[0].mxu0 %v215
    %v288 = vpop.f32.mrb[0].mxu0
    %v289 = vadd.f32 %v210, %v288
    %v290 = vpop.f32.mrb[0].mxu0
    %291 = vdwg.mxu0
    %v292 = vmul.f32 %v284, %v133
    %v293 = vmul.f32 %v289, %v134
    %v294 = vmul.f32 %v284, %v135
    %v295 = vmul.f32 %v289, %v136
    %v296 = vmul.f32 %v284, %v137
    %v297 = vmul.f32 %v289, %v138
    %v298 = vmul.f32 %v284, %v139
    %v299 = vmul.f32 %v289, %v140
    %308 = vrot.lane.b32.xlu0 %v133, 64
    %v309 = vpop.permute.xlu0 %308
    %310 = vrot.lane.b32.xlu0 %v134, 64
    %v311 = vpop.permute.xlu0 %310
    %312 = vrot.lane.b32.xlu0 %v135, 64
    %v313 = vpop.permute.xlu0 %312
    %314 = vrot.lane.b32.xlu0 %v136, 64
    %v315 = vpop.permute.xlu0 %314
    %316 = vrot.lane.b32.xlu0 %v137, 64
    %v317 = vpop.permute.xlu0 %316
    %318 = vrot.lane.b32.xlu0 %v138, 64
    %v319 = vpop.permute.xlu0 %318
    %320 = vrot.lane.b32.xlu0 %v139, 64
    %v321 = vpop.permute.xlu0 %320
    %322 = vrot.lane.b32.xlu0 %v140, 64
    %v323 = vpop.permute.xlu0 %322
    %v332 = vmul.f32 %v284, %v309
    %v333 = vmul.f32 %v289, %v311
    %v334 = vmul.f32 %v284, %v313
    %v335 = vmul.f32 %v289, %v315
    %v336 = vmul.f32 %v284, %v317
    %v337 = vmul.f32 %v289, %v319
    %v338 = vmul.f32 %v284, %v321
    %v339 = vmul.f32 %v289, %v323
    %342 = vrot.lane.b32.xlu0 %v284, 96
    %v343 = vpop.permute.xlu0 %342
    %344 = vrot.lane.b32.xlu0 %v289, 96
    %v345 = vpop.permute.xlu0 %344
    %v347 = vsel %vm159, %v292, 0
    %v350 = vsel %vm159, %v293, 0
    %v353 = vsel %vm159, %v294, 0
    %v356 = vsel %vm159, %v295, 0
    %v359 = vsel %vm159, %v296, 0
    %v362 = vsel %vm159, %v297, 0
    %v365 = vsel %vm159, %v298, 0
    %v368 = vsel %vm159, %v299, 0
    %v370 = vsel %vm159, %v343, 0
    %v372 = vsel %vm159, %v345, 0
    %374 = vmatprep.subr.mxu0 0.0
    %375 = vmatpush1.xpose.msra.mxu0 %v370
    %376 = vmatprep.subr.mxu0 0.0
    %377 = vmatpush1.xpose.msra.mxu0 %v372
    %378 = vmatprep.subr.mxu0 0.0
    %379 = vmatpush1.xpose.msra.mxu0 %v370
    %380 = vmatprep.subr.mxu0 0.0
    %381 = vmatpush1.xpose.msra.mxu0 %v372
    %382 = vmatprep.subr.mxu0 0.0
    %383 = vmatpush1.xpose.msra.mxu0 %v370
    %384 = vmatprep.subr.mxu0 0.0
    %385 = vmatpush1.xpose.msra.mxu0 %v372
    %386 = vmatprep.subr.mxu0 0.0
    %387 = vmatpush1.xpose.msra.mxu0 %v370
    %388 = vmatprep.subr.mxu0 0.0
    %389 = vmatpush1.xpose.msra.mxu0 %v372
    %390 = vmatprep.subr.mxu0 0.0
    %391 = vmatpush1.xpose.msra.mxu0 0.0
    %392 = vmatprep.subr.mxu0 0.0
    %393 = vmatpush1.xpose.msra.mxu0 0.0
    %394 = vmatprep.subr.mxu0 0.0
    %395 = vmatpush1.xpose.msra.mxu0 0.0
    %396 = vmatprep.subr.mxu0 0.0
    %397 = vmatpush1.xpose.msra.mxu0 0.0
    %398 = vmatprep.subr.mxu0 0.0
    %399 = vmatpush1.xpose.msra.mxu0 0.0
    %400 = vmatprep.subr.mxu0 0.0
    %401 = vmatpush1.xpose.msra.mxu0 0.0
    %402 = vmatprep.subr.mxu0 0.0
    %403 = vmatpush1.xpose.msra.mxu0 0.0
    %404 = vmatprep.subr.mxu0 0.0
    %405 = vmatpush1.xpose.msra.mxu0 0.0
    %406 = vmatprep.subr.mxu0 0.0
    %407 = vmatpush1.xpose.msra.mxu0 0.0
    %408 = vmatprep.subr.mxu0 0.0
    %409 = vmatpush1.xpose.msra.mxu0 0.0
    %410 = vmatprep.subr.mxu0 0.0
    %411 = vmatpush1.xpose.msra.mxu0 0.0
    %412 = vmatprep.subr.mxu0 0.0
    %413 = vmatpush1.xpose.msra.mxu0 0.0
    %414 = vmatprep.subr.mxu0 0.0
    %415 = vmatpush1.xpose.msra.mxu0 0.0
    %416 = vmatprep.subr.mxu0 0.0
    %417 = vmatpush1.xpose.msra.mxu0 0.0
    %418 = vmatprep.subr.mxu0 0.0
    %419 = vmatpush1.xpose.msra.mxu0 0.0
    %420 = vmatprep.subr.mxu0 0.0
    %421 = vmatpush1.xpose.msra.mxu0 0.0
    %422 = vmatprep.subr.mxu0 0.0
    %423 = vmatpush1.xpose.msra.mxu0 0.0
    %424 = vmatprep.subr.mxu0 0.0
    %425 = vmatpush1.xpose.msra.mxu0 0.0
    %426 = vmatprep.subr.mxu0 0.0
    %427 = vmatpush1.xpose.msra.mxu0 0.0
    %428 = vmatprep.subr.mxu0 0.0
    %429 = vmatpush1.xpose.msra.mxu0 0.0
    %430 = vmatprep.subr.mxu0 0.0
    %431 = vmatpush1.xpose.msra.mxu0 0.0
    %432 = vmatprep.subr.mxu0 0.0
    %433 = vmatpush1.xpose.msra.mxu0 0.0
    %434 = vmatprep.subr.mxu0 0.0
    %435 = vmatpush1.xpose.msra.mxu0 0.0
    %436 = vmatprep.subr.mxu0 0.0
    %437 = vmatpush1.xpose.msra.mxu0 0.0
    %438 = vmatprep.mubr.f32.mxu0 0.0
    %439 = vmatmul.mubr.f32.gmra.mrb[0].mxu0 %v347
    %v440 = vpop.f32.mrb[0].mxu0
    %v441 = vadd.f32 0.0, %v440
    %v442 = vpop.f32.mrb[0].mxu0
    %443 = vmatprep.mubr.f32.mxu0 0.0
    %444 = vmatmul.mubr.f32.gmra.mrb[0].mxu0 %v350
    %v445 = vpop.f32.mrb[0].mxu0
    %v446 = vadd.f32 0.0, %v445
    %v447 = vpop.f32.mrb[0].mxu0
    %448 = vmatprep.mubr.f32.mxu0 0.0
    %449 = vmatmul.mubr.f32.gmra.mrb[0].mxu0 %v353
    %v450 = vpop.f32.mrb[0].mxu0
    %v451 = vadd.f32 0.0, %v450
    %v452 = vpop.f32.mrb[0].mxu0
    %453 = vmatprep.mubr.f32.mxu0 0.0
    %454 = vmatmul.mubr.f32.gmra.mrb[0].mxu0 %v356
    %v455 = vpop.f32.mrb[0].mxu0
    %v456 = vadd.f32 0.0, %v455
    %v457 = vpop.f32.mrb[0].mxu0
    %458 = vmatprep.mubr.f32.mxu0 0.0
    %459 = vmatmul.mubr.f32.gmra.mrb[0].mxu0 %v359
    %v460 = vpop.f32.mrb[0].mxu0
    %v461 = vadd.f32 0.0, %v460
    %v462 = vpop.f32.mrb[0].mxu0
    %463 = vmatprep.mubr.f32.mxu0 0.0
    %464 = vmatmul.mubr.f32.gmra.mrb[0].mxu0 %v362
    %v465 = vpop.f32.mrb[0].mxu0
    %v466 = vadd.f32 0.0, %v465
    %v467 = vpop.f32.mrb[0].mxu0
    %468 = vmatprep.mubr.f32.mxu0 0.0
    %469 = vmatmul.mubr.f32.gmra.mrb[0].mxu0 %v365
    %v470 = vpop.f32.mrb[0].mxu0
    %v471 = vadd.f32 0.0, %v470
    %v472 = vpop.f32.mrb[0].mxu0
    %473 = vmatprep.mubr.f32.mxu0 0.0
    %474 = vmatmul.mubr.f32.gmra.mrb[0].mxu0 %v368
    %v475 = vpop.f32.mrb[0].mxu0
    %v476 = vadd.f32 0.0, %v475
    %v477 = vpop.f32.mrb[0].mxu0
    %478 = vdwg.mxu0
    %v479 = vmul.f32 %v441, 0.35355338
    %v480 = vmul.f32 %v446, 0.35355338
    %v481 = vmul.f32 %v451, 0.35355338
    %v482 = vmul.f32 %v456, 0.35355338
    %v483 = vmul.f32 %v461, 0.35355338
    %v484 = vmul.f32 %v466, 0.35355338
    %v485 = vmul.f32 %v471, 0.35355338
    %v486 = vmul.f32 %v476, 0.35355338
    %v487 = vadd.f32 %v479, %v141
    %v488 = vadd.f32 %v480, %v142
    %v489 = vadd.f32 %v481, %v143
    %v490 = vadd.f32 %v482, %v144
    %v491 = vadd.f32 %v483, %v145
    %v492 = vadd.f32 %v484, %v146
    %v493 = vadd.f32 %v485, %v147
    %v494 = vadd.f32 %v486, %v148
    %vm495 = vcmask 523264
    %v496 = vsel %vm495, %v487, -inf
    %497 = vmax.xlane.f32.xlu0 %v496
    %v498 = vpop.xlane.xlu0 %497
    %v499 = vsel %vm495, %v488, -inf
    %500 = vmax.xlane.f32.xlu0 %v499
    %v501 = vpop.xlane.xlu0 %500
    %v502 = vsel %vm495, %v489, -inf
    %503 = vmax.xlane.f32.xlu0 %v502
    %v504 = vpop.xlane.xlu0 %503
    %v505 = vsel %vm495, %v490, -inf
    %506 = vmax.xlane.f32.xlu0 %v505
    %v507 = vpop.xlane.xlu0 %506
    %v508 = vsel %vm495, %v491, -inf
    %509 = vmax.xlane.f32.xlu0 %v508
    %v510 = vpop.xlane.xlu0 %509
    %v511 = vsel %vm495, %v492, -inf
    %512 = vmax.xlane.f32.xlu0 %v511
    %v513 = vpop.xlane.xlu0 %512
    %v514 = vsel %vm495, %v493, -inf
    %515 = vmax.xlane.f32.xlu0 %v514
    %v516 = vpop.xlane.xlu0 %515
    %v517 = vsel %vm495, %v494, -inf
    %518 = vmax.xlane.f32.xlu0 %v517
    %v519 = vpop.xlane.xlu0 %518
    %v520 = vsub.f32 %v487, %v498
    %v521 = vsub.f32 %v488, %v501
    %v522 = vsub.f32 %v489, %v504
    %v523 = vsub.f32 %v490, %v507
    %v524 = vsub.f32 %v491, %v510
    %v525 = vsub.f32 %v492, %v513
    %v526 = vsub.f32 %v493, %v516
    %v527 = vsub.f32 %v494, %v519
    %v528 = vmul.f32 %v520, 1.442695
    %v529 = vpow.pop %v528
    %v530 = vmul.f32 %v521, 1.442695
    %v531 = vpow.pop %v530
    %v532 = vmul.f32 %v522, 1.442695
    %v533 = vpow.pop %v532
    %v534 = vmul.f32 %v523, 1.442695
    %v535 = vpow.pop %v534
    %v536 = vmul.f32 %v524, 1.442695
    %v537 = vpow.pop %v536
    %v538 = vmul.f32 %v525, 1.442695
    %v539 = vpow.pop %v538
    %v540 = vmul.f32 %v526, 1.442695
    %v541 = vpow.pop %v540
    %v542 = vmul.f32 %v527, 1.442695
    %v543 = vpow.pop %v542
    %v544 = vsel %vm495, %v529, 0.0
    %545 = vadd.xlane.f32.xlu0 %v544
    %v546 = vpop.xlane.xlu0 %545
    %v547 = vsel %vm495, %v531, 0.0
    %548 = vadd.xlane.f32.xlu0 %v547
    %v549 = vpop.xlane.xlu0 %548
    %v550 = vsel %vm495, %v533, 0.0
    %551 = vadd.xlane.f32.xlu0 %v550
    %v552 = vpop.xlane.xlu0 %551
    %v553 = vsel %vm495, %v535, 0.0
    %554 = vadd.xlane.f32.xlu0 %v553
    %v555 = vpop.xlane.xlu0 %554
    %v556 = vsel %vm495, %v537, 0.0
    %557 = vadd.xlane.f32.xlu0 %v556
    %v558 = vpop.xlane.xlu0 %557
    %v559 = vsel %vm495, %v539, 0.0
    %560 = vadd.xlane.f32.xlu0 %v559
    %v561 = vpop.xlane.xlu0 %560
    %v562 = vsel %vm495, %v541, 0.0
    %563 = vadd.xlane.f32.xlu0 %v562
    %v564 = vpop.xlane.xlu0 %563
    %v565 = vsel %vm495, %v543, 0.0
    %566 = vadd.xlane.f32.xlu0 %v565
    %v567 = vpop.xlane.xlu0 %566
    %v568 = vrcp.pop %v546
    %v569 = vrcp.pop %v549
    %v570 = vrcp.pop %v552
    %v571 = vrcp.pop %v555
    %v572 = vrcp.pop %v558
    %v573 = vrcp.pop %v561
    %v574 = vrcp.pop %v564
    %v575 = vrcp.pop %v567
    %v576 = vmul.f32 %v529, %v568
    %v577 = vmul.f32 %v531, %v569
    %v578 = vmul.f32 %v533, %v570
    %v579 = vmul.f32 %v535, %v571
    %v580 = vmul.f32 %v537, %v572
    %v581 = vmul.f32 %v539, %v573
    %v582 = vmul.f32 %v541, %v574
    %v583 = vmul.f32 %v543, %v575
    %592 = vrot.lane.b32.xlu0 %v332, 64
    %v593 = vpop.permute.xlu0 %592
    %594 = vrot.lane.b32.xlu0 %v333, 64
    %v595 = vpop.permute.xlu0 %594
    %596 = vrot.lane.b32.xlu0 %v334, 64
    %v597 = vpop.permute.xlu0 %596
    %598 = vrot.lane.b32.xlu0 %v335, 64
    %v599 = vpop.permute.xlu0 %598
    %600 = vrot.lane.b32.xlu0 %v336, 64
    %v601 = vpop.permute.xlu0 %600
    %602 = vrot.lane.b32.xlu0 %v337, 64
    %v603 = vpop.permute.xlu0 %602
    %604 = vrot.lane.b32.xlu0 %v338, 64
    %v605 = vpop.permute.xlu0 %604
    %606 = vrot.lane.b32.xlu0 %v339, 64
    %v607 = vpop.permute.xlu0 %606
    %v617 = vsel %vm495, %v576, 0
    %v620 = vsel %vm495, %v577, 0
    %v623 = vsel %vm495, %v578, 0
    %v626 = vsel %vm495, %v579, 0
    %v629 = vsel %vm495, %v580, 0
    %v632 = vsel %vm495, %v581, 0
    %v635 = vsel %vm495, %v582, 0
    %v638 = vsel %vm495, %v583, 0
    %640 = vmatprep.subr.mxu0 0.0
    %641 = vmatpush1.msra.mxu0 %v593
    %642 = vmatprep.subr.mxu0 0.0
    %643 = vmatpush1.msra.mxu0 %v595
    %644 = vmatprep.subr.mxu0 0.0
    %645 = vmatpush1.msra.mxu0 %v597
    %646 = vmatprep.subr.mxu0 0.0
    %647 = vmatpush1.msra.mxu0 %v599
    %648 = vmatprep.subr.mxu0 0.0
    %649 = vmatpush1.msra.mxu0 %v601
    %650 = vmatprep.subr.mxu0 0.0
    %651 = vmatpush1.msra.mxu0 %v603
    %652 = vmatprep.subr.mxu0 0.0
    %653 = vmatpush1.msra.mxu0 %v605
    %654 = vmatprep.subr.mxu0 0.0
    %655 = vmatpush1.msra.mxu0 %v607
    %656 = vmatprep.subr.mxu0 0.0
    %657 = vmatpush1.msra.mxu0 0.0
    %658 = vmatprep.subr.mxu0 0.0
    %659 = vmatpush1.msra.mxu0 0.0
    %660 = vmatprep.subr.mxu0 0.0
    %661 = vmatpush1.msra.mxu0 0.0
    %662 = vmatprep.subr.mxu0 0.0
    %663 = vmatpush1.msra.mxu0 0.0
    %664 = vmatprep.subr.mxu0 0.0
    %665 = vmatpush1.msra.mxu0 0.0
    %666 = vmatprep.subr.mxu0 0.0
    %667 = vmatpush1.msra.mxu0 0.0
    %668 = vmatprep.subr.mxu0 0.0
    %669 = vmatpush1.msra.mxu0 0.0
    %670 = vmatprep.subr.mxu0 0.0
    %671 = vmatpush1.msra.mxu0 0.0
    %672 = vmatprep.subr.mxu0 0.0
    %673 = vmatpush1.msra.mxu0 0.0
    %674 = vmatprep.subr.mxu0 0.0
    %675 = vmatpush1.msra.mxu0 0.0
    %676 = vmatprep.subr.mxu0 0.0
    %677 = vmatpush1.msra.mxu0 0.0
    %678 = vmatprep.subr.mxu0 0.0
    %679 = vmatpush1.msra.mxu0 0.0
    %680 = vmatprep.subr.mxu0 0.0
    %681 = vmatpush1.msra.mxu0 0.0
    %682 = vmatprep.subr.mxu0 0.0
    %683 = vmatpush1.msra.mxu0 0.0
    %684 = vmatprep.subr.mxu0 0.0
    %685 = vmatpush1.msra.mxu0 0.0
    %686 = vmatprep.subr.mxu0 0.0
    %687 = vmatpush1.msra.mxu0 0.0
    %688 = vmatprep.subr.mxu0 0.0
    %689 = vmatpush1.msra.mxu0 0.0
    %690 = vmatprep.subr.mxu0 0.0
    %691 = vmatpush1.msra.mxu0 0.0
    %692 = vmatprep.subr.mxu0 0.0
    %693 = vmatpush1.msra.mxu0 0.0
    %694 = vmatprep.subr.mxu0 0.0
    %695 = vmatpush1.msra.mxu0 0.0
    %696 = vmatprep.subr.mxu0 0.0
    %697 = vmatpush1.msra.mxu0 0.0
    %698 = vmatprep.subr.mxu0 0.0
    %699 = vmatpush1.msra.mxu0 0.0
    %700 = vmatprep.subr.mxu0 0.0
    %701 = vmatpush1.msra.mxu0 0.0
    %702 = vmatprep.subr.mxu0 0.0
    %703 = vmatpush1.msra.mxu0 0.0
    %704 = vmatprep.mubr.f32.mxu0 0.0
    %705 = vmatmul.mubr.f32.gmra.mrb[0].mxu0 %v617
    %v706 = vpop.f32.mrb[0].mxu0
    %v707 = vadd.f32 0.0, %v706
    %v708 = vpop.f32.mrb[0].mxu0
    %709 = vmatprep.mubr.f32.mxu0 0.0
    %710 = vmatmul.mubr.f32.gmra.mrb[0].mxu0 %v620
    %v711 = vpop.f32.mrb[0].mxu0
    %v712 = vadd.f32 0.0, %v711
    %v713 = vpop.f32.mrb[0].mxu0
    %714 = vmatprep.mubr.f32.mxu0 0.0
    %715 = vmatmul.mubr.f32.gmra.mrb[0].mxu0 %v623
    %v716 = vpop.f32.mrb[0].mxu0
    %v717 = vadd.f32 0.0, %v716
    %v718 = vpop.f32.mrb[0].mxu0
    %719 = vmatprep.mubr.f32.mxu0 0.0
    %720 = vmatmul.mubr.f32.gmra.mrb[0].mxu0 %v626
    %v721 = vpop.f32.mrb[0].mxu0
    %v722 = vadd.f32 0.0, %v721
    %v723 = vpop.f32.mrb[0].mxu0
    %724 = vmatprep.mubr.f32.mxu0 0.0
    %725 = vmatmul.mubr.f32.gmra.mrb[0].mxu0 %v629
    %v726 = vpop.f32.mrb[0].mxu0
    %v727 = vadd.f32 0.0, %v726
    %v728 = vpop.f32.mrb[0].mxu0
    %729 = vmatprep.mubr.f32.mxu0 0.0
    %730 = vmatmul.mubr.f32.gmra.mrb[0].mxu0 %v632
    %v731 = vpop.f32.mrb[0].mxu0
    %v732 = vadd.f32 0.0, %v731
    %v733 = vpop.f32.mrb[0].mxu0
    %734 = vmatprep.mubr.f32.mxu0 0.0
    %735 = vmatmul.mubr.f32.gmra.mrb[0].mxu0 %v635
    %v736 = vpop.f32.mrb[0].mxu0
    %v737 = vadd.f32 0.0, %v736
    %v738 = vpop.f32.mrb[0].mxu0
    %739 = vmatprep.mubr.f32.mxu0 0.0
    %740 = vmatmul.mubr.f32.gmra.mrb[0].mxu0 %v638
    %v741 = vpop.f32.mrb[0].mxu0
    %v742 = vadd.f32 0.0, %v741
    %v743 = vpop.f32.mrb[0].mxu0
    %744 = vdwg.mxu0
    %v746 = vsel %vm495, %v149, 0
    %v749 = vsel %vm495, %v150, 0
    %751 = vmatprep.subr.mxu0 0.0
    %752 = vmatpush1.msra.mxu0 %v707
    %753 = vmatprep.subr.mxu0 0.0
    %754 = vmatpush1.msra.mxu0 %v712
    %755 = vmatprep.subr.mxu0 0.0
    %756 = vmatpush1.msra.mxu0 %v717
    %757 = vmatprep.subr.mxu0 0.0
    %758 = vmatpush1.msra.mxu0 %v722
    %759 = vmatprep.subr.mxu0 0.0
    %760 = vmatpush1.msra.mxu0 %v727
    %761 = vmatprep.subr.mxu0 0.0
    %762 = vmatpush1.msra.mxu0 %v732
    %763 = vmatprep.subr.mxu0 0.0
    %764 = vmatpush1.msra.mxu0 %v737
    %765 = vmatprep.subr.mxu0 0.0
    %766 = vmatpush1.msra.mxu0 %v742
    %767 = vmatprep.subr.mxu0 0.0
    %768 = vmatpush1.msra.mxu0 0.0
    %769 = vmatprep.subr.mxu0 0.0
    %770 = vmatpush1.msra.mxu0 0.0
    %771 = vmatprep.subr.mxu0 0.0
    %772 = vmatpush1.msra.mxu0 0.0
    %773 = vmatprep.subr.mxu0 0.0
    %774 = vmatpush1.msra.mxu0 0.0
    %775 = vmatprep.subr.mxu0 0.0
    %776 = vmatpush1.msra.mxu0 0.0
    %777 = vmatprep.subr.mxu0 0.0
    %778 = vmatpush1.msra.mxu0 0.0
    %779 = vmatprep.subr.mxu0 0.0
    %780 = vmatpush1.msra.mxu0 0.0
    %781 = vmatprep.subr.mxu0 0.0
    %782 = vmatpush1.msra.mxu0 0.0
    %783 = vmatprep.subr.mxu0 0.0
    %784 = vmatpush1.msra.mxu0 0.0
    %785 = vmatprep.subr.mxu0 0.0
    %786 = vmatpush1.msra.mxu0 0.0
    %787 = vmatprep.subr.mxu0 0.0
    %788 = vmatpush1.msra.mxu0 0.0
    %789 = vmatprep.subr.mxu0 0.0
    %790 = vmatpush1.msra.mxu0 0.0
    %791 = vmatprep.subr.mxu0 0.0
    %792 = vmatpush1.msra.mxu0 0.0
    %793 = vmatprep.subr.mxu0 0.0
    %794 = vmatpush1.msra.mxu0 0.0
    %795 = vmatprep.subr.mxu0 0.0
    %796 = vmatpush1.msra.mxu0 0.0
    %797 = vmatprep.subr.mxu0 0.0
    %798 = vmatpush1.msra.mxu0 0.0
    %799 = vmatprep.subr.mxu0 0.0
    %800 = vmatpush1.msra.mxu0 0.0
    %801 = vmatprep.subr.mxu0 0.0
    %802 = vmatpush1.msra.mxu0 0.0
    %803 = vmatprep.subr.mxu0 0.0
    %804 = vmatpush1.msra.mxu0 0.0
    %805 = vmatprep.subr.mxu0 0.0
    %806 = vmatpush1.msra.mxu0 0.0
    %807 = vmatprep.subr.mxu0 0.0
    %808 = vmatpush1.msra.mxu0 0.0
    %809 = vmatprep.subr.mxu0 0.0
    %810 = vmatpush1.msra.mxu0 0.0
    %811 = vmatprep.subr.mxu0 0.0
    %812 = vmatpush1.msra.mxu0 0.0
    %813 = vmatprep.subr.mxu0 0.0
    %814 = vmatpush1.msra.mxu0 0.0
    %815 = vmatprep.mubr.f32.mxu0 0.0
    %816 = vmatmul.mubr.f32.gmra.mrb[0].mxu0 %v746
    %v817 = vpop.f32.mrb[0].mxu0
    %v818 = vadd.f32 0.0, %v817
    %v819 = vpop.f32.mrb[0].mxu0
    %820 = vmatprep.mubr.f32.mxu0 0.0
    %821 = vmatmul.mubr.f32.gmra.mrb[0].mxu0 %v749
    %v822 = vpop.f32.mrb[0].mxu0
    %v823 = vadd.f32 0.0, %v822
    %v824 = vpop.f32.mrb[0].mxu0
    %825 = vdwg.mxu0
    %v826 = vld [vmem:[#allocation2 + $0x68] sm:$0xff]
    %v827 = vld [vmem:[#allocation2 + $0x70] sm:$0xff]
    %v828 = vld [vmem:[#allocation2 + $0x78] sm:$0xff]
    %v829 = vld [vmem:[#allocation2 + $0x80] sm:$0xff]
    %v830 = vlaneseq
    %v831 = vshrl.u32 %v830, 7
    %v832 = vsub.s32 0, %v831
    %v833 = vrot.slane %v154, %v832
    %v835 = vsel %vm159, %v818, 0
    %v838 = vsel %vm159, %v823, 0
    %840 = vmatprep.subr.mxu0 0.0
    %841 = vmatpush1.msra.mxu0 %v826
    %842 = vmatprep.subr.mxu0 0.0
    %843 = vmatpush1.msra.mxu0 %v827
    %844 = vmatprep.subr.mxu0 0.0
    %845 = vmatpush1.msra.mxu0 %v828
    %846 = vmatprep.subr.mxu0 0.0
    %847 = vmatpush1.msra.mxu0 %v829
    %848 = vmatprep.subr.mxu0 0.0
    %849 = vmatpush1.msra.mxu0 0.0
    %850 = vmatprep.subr.mxu0 0.0
    %851 = vmatpush1.msra.mxu0 0.0
    %852 = vmatprep.subr.mxu0 0.0
    %853 = vmatpush1.msra.mxu0 0.0
    %854 = vmatprep.subr.mxu0 0.0
    %855 = vmatpush1.msra.mxu0 0.0
    %856 = vmatprep.subr.mxu0 0.0
    %857 = vmatpush1.msra.mxu0 0.0
    %858 = vmatprep.subr.mxu0 0.0
    %859 = vmatpush1.msra.mxu0 0.0
    %860 = vmatprep.subr.mxu0 0.0
    %861 = vmatpush1.msra.mxu0 0.0
    %862 = vmatprep.subr.mxu0 0.0
    %863 = vmatpush1.msra.mxu0 0.0
    %864 = vmatprep.subr.mxu0 0.0
    %865 = vmatpush1.msra.mxu0 0.0
    %866 = vmatprep.subr.mxu0 0.0
    %867 = vmatpush1.msra.mxu0 0.0
    %868 = vmatprep.subr.mxu0 0.0
    %869 = vmatpush1.msra.mxu0 0.0
    %870 = vmatprep.subr.mxu0 0.0
    %871 = vmatpush1.msra.mxu0 0.0
    %872 = vmatprep.subr.mxu0 0.0
    %873 = vmatpush1.msra.mxu0 0.0
    %874 = vmatprep.subr.mxu0 0.0
    %875 = vmatpush1.msra.mxu0 0.0
    %876 = vmatprep.subr.mxu0 0.0
    %877 = vmatpush1.msra.mxu0 0.0
    %878 = vmatprep.subr.mxu0 0.0
    %879 = vmatpush1.msra.mxu0 0.0
    %880 = vmatprep.subr.mxu0 0.0
    %881 = vmatpush1.msra.mxu0 0.0
    %882 = vmatprep.subr.mxu0 0.0
    %883 = vmatpush1.msra.mxu0 0.0
    %884 = vmatprep.subr.mxu0 0.0
    %885 = vmatpush1.msra.mxu0 0.0
    %886 = vmatprep.subr.mxu0 0.0
    %887 = vmatpush1.msra.mxu0 0.0
    %888 = vmatprep.subr.mxu0 0.0
    %889 = vmatpush1.msra.mxu0 0.0
    %890 = vmatprep.subr.mxu0 0.0
    %891 = vmatpush1.msra.mxu0 0.0
    %892 = vmatprep.subr.mxu0 0.0
    %893 = vmatpush1.msra.mxu0 0.0
    %894 = vmatprep.subr.mxu0 0.0
    %895 = vmatpush1.msra.mxu0 0.0
    %896 = vmatprep.subr.mxu0 0.0
    %897 = vmatpush1.msra.mxu0 0.0
    %898 = vmatprep.subr.mxu0 0.0
    %899 = vmatpush1.msra.mxu0 0.0
    %900 = vmatprep.subr.mxu0 0.0
    %901 = vmatpush1.msra.mxu0 0.0
    %902 = vmatprep.subr.mxu0 0.0
    %903 = vmatpush1.msra.mxu0 0.0
    %904 = vmatprep.mubr.f32.mxu0 0.0
    %905 = vmatmul.mubr.f32.gmra.mrb[0].mxu0 %v835
    %v906 = vpop.f32.mrb[0].mxu0
    %v907 = vadd.f32 %v833, %v906
    %v908 = vpop.f32.mrb[0].mxu0
    %909 = vmatprep.mubr.f32.mxu0 0.0
    %910 = vmatmul.mubr.f32.gmra.mrb[0].mxu0 %v838
    %v911 = vpop.f32.mrb[0].mxu0
    %v912 = vadd.f32 %v833, %v911
    %v913 = vpop.f32.mrb[0].mxu0
    %914 = vdwg.mxu0
    %v915 = vadd.f32 %v125, %v907
    %v916 = vadd.f32 %v130, %v912
    %v917 = vsel %vm159, %v915, 0.0
    %918 = vadd.xlane.f32.xlu0 %v917
    %v919 = vpop.xlane.xlu0 %918
    %v920 = vsel %vm159, %v916, 0.0
    %921 = vadd.xlane.f32.xlu0 %v920
    %v922 = vpop.xlane.xlu0 %921
    %v923 = vmul.f32 %v919, %v166
    %v924 = vmul.f32 %v922, %v166
    %v925 = vmul.f32 %v915, %v915
    %v926 = vmul.f32 %v916, %v916
    %v927 = vsel %vm159, %v925, 0.0
    %928 = vadd.xlane.f32.xlu0 %v927
    %v929 = vpop.xlane.xlu0 %928
    %v930 = vsel %vm159, %v926, 0.0
    %931 = vadd.xlane.f32.xlu0 %v930
    %v932 = vpop.xlane.xlu0 %931
    %v933 = vmul.f32 %v929, %v166
    %v934 = vmul.f32 %v932, %v166
    %v935 = vmul.f32 %v923, %v923
    %v936 = vmul.f32 %v924, %v924
    %v937 = vsub.f32 %v933, %v935
    %v938 = vsub.f32 %v934, %v936
    %v939 = vsub.f32 %v915, %v923
    %v940 = vsub.f32 %v916, %v924
    %v941 = vadd.f32 %v937, 1e-05
    %v942 = vadd.f32 %v938, 1e-05
    %v943 = vrsqrt.pop %v941
    %v944 = vrsqrt.pop %v942
    %v945 = vmul.f32 %v939, %v943
    %v946 = vmul.f32 %v940, %v944
    %v947 = vlaneseq
    %v948 = vshrl.u32 %v947, 7
    %v949 = vsub.s32 0, %v948
    %v950 = vrot.slane %v155, %v949
    %v951 = vmul.f32 %v945, %v950
    %v952 = vmul.f32 %v946, %v950
    %v953 = vlaneseq
    %v954 = vshrl.u32 %v953, 7
    %v955 = vsub.s32 0, %v954
    %v956 = vrot.slane %v156, %v955
    %v957 = vadd.f32 %v951, %v956
    %v958 = vadd.f32 %v952, %v956
    %v959 = vld [vmem:[#allocation2 + $0x88] sm:$0xff]
    %v960 = vld [vmem:[#allocation2 + $0x90] sm:$0xff]
    %v961 = vld [vmem:[#allocation2 + $0x98] sm:$0xff]
    %v962 = vld [vmem:[#allocation2 + $0xa0] sm:$0xff]
    %v963 = vlaneseq
    %v964 = vshrl.u32 %v963, 7
    %v965 = vsub.s32 0, %v964
    %v966 = vrot.slane %v157, %v965
    %v968 = vsel %vm159, %v957, 0
    %v971 = vsel %vm159, %v958, 0
    %973 = vmatprep.subr.mxu0 0.0
    %974 = vmatpush1.msra.mxu0 %v959
    %975 = vmatprep.subr.mxu0 0.0
    %976 = vmatpush1.msra.mxu0 %v960
    %977 = vmatprep.subr.mxu0 0.0
    %978 = vmatpush1.msra.mxu0 %v961
    %979 = vmatprep.subr.mxu0 0.0
    %980 = vmatpush1.msra.mxu0 %v962
    %981 = vmatprep.subr.mxu0 0.0
    %982 = vmatpush1.msra.mxu0 0.0
    %983 = vmatprep.subr.mxu0 0.0
    %984 = vmatpush1.msra.mxu0 0.0
    %985 = vmatprep.subr.mxu0 0.0
    %986 = vmatpush1.msra.mxu0 0.0
    %987 = vmatprep.subr.mxu0 0.0
    %988 = vmatpush1.msra.mxu0 0.0
    %989 = vmatprep.subr.mxu0 0.0
    %990 = vmatpush1.msra.mxu0 0.0
    %991 = vmatprep.subr.mxu0 0.0
    %992 = vmatpush1.msra.mxu0 0.0
    %993 = vmatprep.subr.mxu0 0.0
    %994 = vmatpush1.msra.mxu0 0.0
    %995 = vmatprep.subr.mxu0 0.0
    %996 = vmatpush1.msra.mxu0 0.0
    %997 = vmatprep.subr.mxu0 0.0
    %998 = vmatpush1.msra.mxu0 0.0
    %999 = vmatprep.subr.mxu0 0.0
    %1000 = vmatpush1.msra.mxu0 0.0
    %1001 = vmatprep.subr.mxu0 0.0
    %1002 = vmatpush1.msra.mxu0 0.0
    %1003 = vmatprep.subr.mxu0 0.0
    %1004 = vmatpush1.msra.mxu0 0.0
    %1005 = vmatprep.subr.mxu0 0.0
    %1006 = vmatpush1.msra.mxu0 0.0
    %1007 = vmatprep.subr.mxu0 0.0
    %1008 = vmatpush1.msra.mxu0 0.0
    %1009 = vmatprep.subr.mxu0 0.0
    %1010 = vmatpush1.msra.mxu0 0.0
    %1011 = vmatprep.subr.mxu0 0.0
    %1012 = vmatpush1.msra.mxu0 0.0
    %1013 = vmatprep.subr.mxu0 0.0
    %1014 = vmatpush1.msra.mxu0 0.0
    %1015 = vmatprep.subr.mxu0 0.0
    %1016 = vmatpush1.msra.mxu0 0.0
    %1017 = vmatprep.subr.mxu0 0.0
    %1018 = vmatpush1.msra.mxu0 0.0
    %1019 = vmatprep.subr.mxu0 0.0
    %1020 = vmatpush1.msra.mxu0 0.0
    %1021 = vmatprep.subr.mxu0 0.0
    %1022 = vmatpush1.msra.mxu0 0.0
    %1023 = vmatprep.subr.mxu0 0.0
    %1024 = vmatpush1.msra.mxu0 0.0
    %1025 = vmatprep.subr.mxu0 0.0
    %1026 = vmatpush1.msra.mxu0 0.0
    %1027 = vmatprep.subr.mxu0 0.0
    %1028 = vmatpush1.msra.mxu0 0.0
    %1029 = vmatprep.subr.mxu0 0.0
    %1030 = vmatpush1.msra.mxu0 0.0
    %1031 = vmatprep.subr.mxu0 0.0
    %1032 = vmatpush1.msra.mxu0 0.0
    %1033 = vmatprep.subr.mxu0 0.0
    %1034 = vmatpush1.msra.mxu0 0.0
    %1035 = vmatprep.subr.mxu0 0.0
    %1036 = vmatpush1.msra.mxu0 0.0
    %1037 = vmatprep.mubr.f32.mxu0 0.0
    %1038 = vmatmul.mubr.f32.gmra.mrb[0].mxu0 %v968
    %v1039 = vpop.f32.mrb[0].mxu0
    %v1040 = vadd.f32 %v966, %v1039
    %v1041 = vpop.f32.mrb[0].mxu0
    %1042 = vmatprep.mubr.f32.mxu0 0.0
    %1043 = vmatmul.mubr.f32.gmra.mrb[0].mxu0 %v971
    %v1044 = vpop.f32.mrb[0].mxu0
    %v1045 = vadd.f32 %v966, %v1044
    %v1046 = vpop.f32.mrb[0].mxu0
    %1047 = vdwg.mxu0
    %v1048 = vmax.f32 %v1040, 0.0
    %v1049 = vmax.f32 %v1045, 0.0
    %v1050 = vld [vmem:[#allocation2 + $0xa8] sm:$0xff]
    %v1051 = vld [vmem:[#allocation2 + $0xb0] sm:$0xff]
    %v1052 = vld [vmem:[#allocation2 + $0xb8] sm:$0xff]
    %v1053 = vld [vmem:[#allocation2 + $0xc0] sm:$0xff]
    %v1054 = vld [vmem:[#allocation2 + $0xc8] sm:$0xff]
    %v1055 = vld [vmem:[#allocation2 + $0xd0] sm:$0xff]
    %v1056 = vld [vmem:[#allocation2 + $0xd8] sm:$0xff]
    %v1057 = vld [vmem:[#allocation2 + $0xe0] sm:$0xff]
    %v1059 = vsel %vm495, %v1048, 0
    %v1062 = vsel %vm495, %v1049, 0
    %1064 = vmatprep.subr.mxu0 0.0
    %1065 = vmatpush1.msra.mxu0 %v1050
    %1066 = vmatprep.subr.mxu0 0.0
    %1067 = vmatpush1.msra.mxu0 %v1051
    %1068 = vmatprep.subr.mxu0 0.0
    %1069 = vmatpush1.msra.mxu0 %v1052
    %1070 = vmatprep.subr.mxu0 0.0
    %1071 = vmatpush1.msra.mxu0 %v1053
    %1072 = vmatprep.subr.mxu0 0.0
    %1073 = vmatpush1.msra.mxu0 %v1054
    %1074 = vmatprep.subr.mxu0 0.0
    %1075 = vmatpush1.msra.mxu0 %v1055
    %1076 = vmatprep.subr.mxu0 0.0
    %1077 = vmatpush1.msra.mxu0 %v1056
    %1078 = vmatprep.subr.mxu0 0.0
    %1079 = vmatpush1.msra.mxu0 %v1057
    %1080 = vmatprep.subr.mxu0 0.0
    %1081 = vmatpush1.msra.mxu0 0.0
    %1082 = vmatprep.subr.mxu0 0.0
    %1083 = vmatpush1.msra.mxu0 0.0
    %1084 = vmatprep.subr.mxu0 0.0
    %1085 = vmatpush1.msra.mxu0 0.0
    %1086 = vmatprep.subr.mxu0 0.0
    %1087 = vmatpush1.msra.mxu0 0.0
    %1088 = vmatprep.subr.mxu0 0.0
    %1089 = vmatpush1.msra.mxu0 0.0
    %1090 = vmatprep.subr.mxu0 0.0
    %1091 = vmatpush1.msra.mxu0 0.0
    %1092 = vmatprep.subr.mxu0 0.0
    %1093 = vmatpush1.msra.mxu0 0.0
    %1094 = vmatprep.subr.mxu0 0.0
    %1095 = vmatpush1.msra.mxu0 0.0
    %1096 = vmatprep.subr.mxu0 0.0
    %1097 = vmatpush1.msra.mxu0 0.0
    %1098 = vmatprep.subr.mxu0 0.0
    %1099 = vmatpush1.msra.mxu0 0.0
    %1100 = vmatprep.subr.mxu0 0.0
    %1101 = vmatpush1.msra.mxu0 0.0
    %1102 = vmatprep.subr.mxu0 0.0
    %1103 = vmatpush1.msra.mxu0 0.0
    %1104 = vmatprep.subr.mxu0 0.0
    %1105 = vmatpush1.msra.mxu0 0.0
    %1106 = vmatprep.subr.mxu0 0.0
    %1107 = vmatpush1.msra.mxu0 0.0
    %1108 = vmatprep.subr.mxu0 0.0
    %1109 = vmatpush1.msra.mxu0 0.0
    %1110 = vmatprep.subr.mxu0 0.0
    %1111 = vmatpush1.msra.mxu0 0.0
    %1112 = vmatprep.subr.mxu0 0.0
    %1113 = vmatpush1.msra.mxu0 0.0
    %1114 = vmatprep.subr.mxu0 0.0
    %1115 = vmatpush1.msra.mxu0 0.0
    %1116 = vmatprep.subr.mxu0 0.0
    %1117 = vmatpush1.msra.mxu0 0.0
    %1118 = vmatprep.subr.mxu0 0.0
    %1119 = vmatpush1.msra.mxu0 0.0
    %1120 = vmatprep.subr.mxu0 0.0
    %1121 = vmatpush1.msra.mxu0 0.0
    %1122 = vmatprep.subr.mxu0 0.0
    %1123 = vmatpush1.msra.mxu0 0.0
    %1124 = vmatprep.subr.mxu0 0.0
    %1125 = vmatpush1.msra.mxu0 0.0
    %1126 = vmatprep.subr.mxu0 0.0
    %1127 = vmatpush1.msra.mxu0 0.0
    %1128 = vmatprep.mubr.f32.mxu0 0.0
    %1129 = vmatmul.mubr.f32.gmra.mrb[0].mxu0 %v1059
    %v1130 = vpop.f32.mrb[0].mxu0
    %v1131 = vadd.f32 0.0, %v1130
    %v1132 = vpop.f32.mrb[0].mxu0
    %1133 = vmatprep.mubr.f32.mxu0 0.0
    %1134 = vmatmul.mubr.f32.gmra.mrb[0].mxu0 %v1062
    %v1135 = vpop.f32.mrb[0].mxu0
    %v1136 = vadd.f32 0.0, %v1135
    %v1137 = vpop.f32.mrb[0].mxu0
    %1138 = vdwg.mxu0
    %v1139 = vadd.f32 %v915, %v1131
    %v1140 = vadd.f32 %v916, %v1136
    %v1141 = vlaneseq
    %v1142 = vshrl.u32 %v1141, 7
    %v1143 = vsub.s32 0, %v1142
    %v1144 = vrot.slane %v158, %v1143
    %v1145 = vadd.f32 %v1139, %v1144
    %v1146 = vadd.f32 %v1140, %v1144
    %v1147 = vld [vmem:[#allocation2 + $0x268] sm:$0x1]
    %v1148 = vld [vmem:[#allocation2 + $0x269] sm:$0x1]
    %v1149 = vld [vmem:[#allocation2 + $0x26a] sm:$0x1]
    %v1150 = vld [vmem:[#allocation2 + $0x26b] sm:$0x1]
    %v1151 = vld [vmem:[#allocation2 + $0x26c] sm:$0x1]
    %v1152 = vld [vmem:[#allocation2 + $0x26d] sm:$0x1]
    %v1153 = vld [vmem:[#allocation2 + $0x26e] sm:$0x1]
    %v1154 = vld [vmem:[#allocation2 + $0x26f] sm:$0x1]
    %v1155 = vsel %vm159, %v1145, 0.0
    %1156 = vadd.xlane.f32.xlu0 %v1155
    %v1157 = vpop.xlane.xlu0 %1156
    %v1158 = vsel %vm159, %v1146, 0.0
    %1159 = vadd.xlane.f32.xlu0 %v1158
    %v1160 = vpop.xlane.xlu0 %1159
    %v1161 = vmul.f32 %v1157, %v166
    %v1162 = vmul.f32 %v1160, %v166
    %v1163 = vmul.f32 %v1145, %v1145
    %v1164 = vmul.f32 %v1146, %v1146
    %v1165 = vsel %vm159, %v1163, 0.0
    %1166 = vadd.xlane.f32.xlu0 %v1165
    %v1167 = vpop.xlane.xlu0 %1166
    %v1168 = vsel %vm159, %v1164, 0.0
    %1169 = vadd.xlane.f32.xlu0 %v1168
    %v1170 = vpop.xlane.xlu0 %1169
    %v1171 = vmul.f32 %v1167, %v166
    %v1172 = vmul.f32 %v1170, %v166
    %v1173 = vmul.f32 %v1161, %v1161
    %v1174 = vmul.f32 %v1162, %v1162
    %v1175 = vsub.f32 %v1171, %v1173
    %v1176 = vsub.f32 %v1172, %v1174
    %v1177 = vsub.f32 %v1145, %v1161
    %v1178 = vsub.f32 %v1146, %v1162
    %v1179 = vadd.f32 %v1175, 1e-05
    %v1180 = vadd.f32 %v1176, 1e-05
    %v1181 = vrsqrt.pop %v1179
    %v1182 = vrsqrt.pop %v1180
    %v1183 = vmul.f32 %v1177, %v1181
    %v1184 = vmul.f32 %v1178, %v1182
    %v1185 = vlaneseq
    %v1186 = vshrl.u32 %v1185, 7
    %v1187 = vsub.s32 0, %v1186
    %v1188 = vrot.slane %v1147, %v1187
    %v1189 = vmul.f32 %v1183, %v1188
    %v1190 = vmul.f32 %v1184, %v1188
    %v1191 = vlaneseq
    %v1192 = vshrl.u32 %v1191, 7
    %v1193 = vsub.s32 0, %v1192
    %v1194 = vrot.slane %v1148, %v1193
    %v1195 = vadd.f32 %v1189, %v1194
    %v1196 = vadd.f32 %v1190, %v1194
    %v1197 = vld [vmem:[#allocation2 + $0xe8] sm:$0xff]
    %v1198 = vld [vmem:[#allocation2 + $0xf0] sm:$0xff]
    %v1199 = vld [vmem:[#allocation2 + $0xf8] sm:$0xff]
    %v1200 = vld [vmem:[#allocation2 + $0x100] sm:$0xff]
    %v1201 = vlaneseq
    %v1202 = vshrl.u32 %v1201, 7
    %v1203 = vsub.s32 0, %v1202
    %v1204 = vrot.slane %v1149, %v1203
    %v1206 = vsel %vm159, %v1195, 0
    %v1209 = vsel %vm159, %v1196, 0
    %1211 = vmatprep.subr.mxu0 0.0
    %1212 = vmatpush1.msra.mxu0 %v1197
    %1213 = vmatprep.subr.mxu0 0.0
    %1214 = vmatpush1.msra.mxu0 %v1198
    %1215 = vmatprep.subr.mxu0 0.0
    %1216 = vmatpush1.msra.mxu0 %v1199
    %1217 = vmatprep.subr.mxu0 0.0
    %1218 = vmatpush1.msra.mxu0 %v1200
    %1219 = vmatprep.subr.mxu0 0.0
    %1220 = vmatpush1.msra.mxu0 0.0
    %1221 = vmatprep.subr.mxu0 0.0
    %1222 = vmatpush1.msra.mxu0 0.0
    %1223 = vmatprep.subr.mxu0 0.0
    %1224 = vmatpush1.msra.mxu0 0.0
    %1225 = vmatprep.subr.mxu0 0.0
    %1226 = vmatpush1.msra.mxu0 0.0
    %1227 = vmatprep.subr.mxu0 0.0
    %1228 = vmatpush1.msra.mxu0 0.0
    %1229 = vmatprep.subr.mxu0 0.0
    %1230 = vmatpush1.msra.mxu0 0.0
    %1231 = vmatprep.subr.mxu0 0.0
    %1232 = vmatpush1.msra.mxu0 0.0
    %1233 = vmatprep.subr.mxu0 0.0
    %1234 = vmatpush1.msra.mxu0 0.0
    %1235 = vmatprep.subr.mxu0 0.0
    %1236 = vmatpush1.msra.mxu0 0.0
    %1237 = vmatprep.subr.mxu0 0.0
    %1238 = vmatpush1.msra.mxu0 0.0
    %1239 = vmatprep.subr.mxu0 0.0
    %1240 = vmatpush1.msra.mxu0 0.0
    %1241 = vmatprep.subr.mxu0 0.0
    %1242 = vmatpush1.msra.mxu0 0.0
    %1243 = vmatprep.subr.mxu0 0.0
    %1244 = vmatpush1.msra.mxu0 0.0
    %1245 = vmatprep.subr.mxu0 0.0
    %1246 = vmatpush1.msra.mxu0 0.0
    %1247 = vmatprep.subr.mxu0 0.0
    %1248 = vmatpush1.msra.mxu0 0.0
    %1249 = vmatprep.subr.mxu0 0.0
    %1250 = vmatpush1.msra.mxu0 0.0
    %1251 = vmatprep.subr.mxu0 0.0
    %1252 = vmatpush1.msra.mxu0 0.0
    %1253 = vmatprep.subr.mxu0 0.0
    %1254 = vmatpush1.msra.mxu0 0.0
    %1255 = vmatprep.subr.mxu0 0.0
    %1256 = vmatpush1.msra.mxu0 0.0
    %1257 = vmatprep.subr.mxu0 0.0
    %1258 = vmatpush1.msra.mxu0 0.0
    %1259 = vmatprep.subr.mxu0 0.0
    %1260 = vmatpush1.msra.mxu0 0.0
    %1261 = vmatprep.subr.mxu0 0.0
    %1262 = vmatpush1.msra.mxu0 0.0
    %1263 = vmatprep.subr.mxu0 0.0
    %1264 = vmatpush1.msra.mxu0 0.0
    %1265 = vmatprep.subr.mxu0 0.0
    %1266 = vmatpush1.msra.mxu0 0.0
    %1267 = vmatprep.subr.mxu0 0.0
    %1268 = vmatpush1.msra.mxu0 0.0
    %1269 = vmatprep.subr.mxu0 0.0
    %1270 = vmatpush1.msra.mxu0 0.0
    %1271 = vmatprep.subr.mxu0 0.0
    %1272 = vmatpush1.msra.mxu0 0.0
    %1273 = vmatprep.subr.mxu0 0.0
    %1274 = vmatpush1.msra.mxu0 0.0
    %1275 = vmatprep.mubr.f32.mxu0 0.0
    %1276 = vmatmul.mubr.f32.gmra.mrb[0].mxu0 %v1206
    %v1277 = vpop.f32.mrb[0].mxu0
    %v1278 = vadd.f32 %v1204, %v1277
    %v1279 = vpop.f32.mrb[0].mxu0
    %1280 = vmatprep.mubr.f32.mxu0 0.0
    %1281 = vmatmul.mubr.f32.gmra.mrb[0].mxu0 %v1209
    %v1282 = vpop.f32.mrb[0].mxu0
    %v1283 = vadd.f32 %v1204, %v1282
    %v1284 = vpop.f32.mrb[0].mxu0
    %1285 = vdwg.mxu0
    %v1286 = vmul.f32 %v1278, %v133
    %v1287 = vmul.f32 %v1283, %v134
    %v1288 = vmul.f32 %v1278, %v135
    %v1289 = vmul.f32 %v1283, %v136
    %v1290 = vmul.f32 %v1278, %v137
    %v1291 = vmul.f32 %v1283, %v138
    %v1292 = vmul.f32 %v1278, %v139
    %v1293 = vmul.f32 %v1283, %v140
    %v1294 = vmul.f32 %v1278, %v309
    %v1295 = vmul.f32 %v1283, %v311
    %v1296 = vmul.f32 %v1278, %v313
    %v1297 = vmul.f32 %v1283, %v315
    %v1298 = vmul.f32 %v1278, %v317
    %v1299 = vmul.f32 %v1283, %v319
    %v1300 = vmul.f32 %v1278, %v321
    %v1301 = vmul.f32 %v1283, %v323
    %1304 = vrot.lane.b32.xlu0 %v1278, 96
    %v1305 = vpop.permute.xlu0 %1304
    %1306 = vrot.lane.b32.xlu0 %v1283, 96
    %v1307 = vpop.permute.xlu0 %1306
    %v1309 = vsel %vm159, %v1286, 0
    %v1312 = vsel %vm159, %v1287, 0
    %v1315 = vsel %vm159, %v1288, 0
    %v1318 = vsel %vm159, %v1289, 0
    %v1321 = vsel %vm159, %v1290, 0
    %v1324 = vsel %vm159, %v1291, 0
    %v1327 = vsel %vm159, %v1292, 0
    %v1330 = vsel %vm159, %v1293, 0
    %v1332 = vsel %vm159, %v1305, 0
    %v1334 = vsel %vm159, %v1307, 0
    %1336 = vmatprep.subr.mxu0 0.0
    %1337 = vmatpush1.xpose.msra.mxu0 %v1332
    %1338 = vmatprep.subr.mxu0 0.0
    %1339 = vmatpush1.xpose.msra.mxu0 %v1334
    %1340 = vmatprep.subr.mxu0 0.0
    %1341 = vmatpush1.xpose.msra.mxu0 %v1332
    %1342 = vmatprep.subr.mxu0 0.0
    %1343 = vmatpush1.xpose.msra.mxu0 %v1334
    %1344 = vmatprep.subr.mxu0 0.0
    %1345 = vmatpush1.xpose.msra.mxu0 %v1332
    %1346 = vmatprep.subr.mxu0 0.0
    %1347 = vmatpush1.xpose.msra.mxu0 %v1334
    %1348 = vmatprep.subr.mxu0 0.0
    %1349 = vmatpush1.xpose.msra.mxu0 %v1332
    %1350 = vmatprep.subr.mxu0 0.0
    %1351 = vmatpush1.xpose.msra.mxu0 %v1334
    %1352 = vmatprep.subr.mxu0 0.0
    %1353 = vmatpush1.xpose.msra.mxu0 0.0
    %1354 = vmatprep.subr.mxu0 0.0
    %1355 = vmatpush1.xpose.msra.mxu0 0.0
    %1356 = vmatprep.subr.mxu0 0.0
    %1357 = vmatpush1.xpose.msra.mxu0 0.0
    %1358 = vmatprep.subr.mxu0 0.0
    %1359 = vmatpush1.xpose.msra.mxu0 0.0
    %1360 = vmatprep.subr.mxu0 0.0
    %1361 = vmatpush1.xpose.msra.mxu0 0.0
    %1362 = vmatprep.subr.mxu0 0.0
    %1363 = vmatpush1.xpose.msra.mxu0 0.0
    %1364 = vmatprep.subr.mxu0 0.0
    %1365 = vmatpush1.xpose.msra.mxu0 0.0
    %1366 = vmatprep.subr.mxu0 0.0
    %1367 = vmatpush1.xpose.msra.mxu0 0.0
    %1368 = vmatprep.subr.mxu0 0.0
    %1369 = vmatpush1.xpose.msra.mxu0 0.0
    %1370 = vmatprep.subr.mxu0 0.0
    %1371 = vmatpush1.xpose.msra.mxu0 0.0
    %1372 = vmatprep.subr.mxu0 0.0
    %1373 = vmatpush1.xpose.msra.mxu0 0.0
    %1374 = vmatprep.subr.mxu0 0.0
    %1375 = vmatpush1.xpose.msra.mxu0 0.0
    %1376 = vmatprep.subr.mxu0 0.0
    %1377 = vmatpush1.xpose.msra.mxu0 0.0
    %1378 = vmatprep.subr.mxu0 0.0
    %1379 = vmatpush1.xpose.msra.mxu0 0.0
    %1380 = vmatprep.subr.mxu0 0.0
    %1381 = vmatpush1.xpose.msra.mxu0 0.0
    %1382 = vmatprep.subr.mxu0 0.0
    %1383 = vmatpush1.xpose.msra.mxu0 0.0
    %1384 = vmatprep.subr.mxu0 0.0
    %1385 = vmatpush1.xpose.msra.mxu0 0.0
    %1386 = vmatprep.subr.mxu0 0.0
    %1387 = vmatpush1.xpose.msra.mxu0 0.0
    %1388 = vmatprep.subr.mxu0 0.0
    %1389 = vmatpush1.xpose.msra.mxu0 0.0
    %1390 = vmatprep.subr.mxu0 0.0
    %1391 = vmatpush1.xpose.msra.mxu0 0.0
    %1392 = vmatprep.subr.mxu0 0.0
    %1393 = vmatpush1.xpose.msra.mxu0 0.0
    %1394 = vmatprep.subr.mxu0 0.0
    %1395 = vmatpush1.xpose.msra.mxu0 0.0
    %1396 = vmatprep.subr.mxu0 0.0
    %1397 = vmatpush1.xpose.msra.mxu0 0.0
    %1398 = vmatprep.subr.mxu0 0.0
    %1399 = vmatpush1.xpose.msra.mxu0 0.0
    %1400 = vmatprep.mubr.f32.mxu0 0.0
    %1401 = vmatmul.mubr.f32.gmra.mrb[0].mxu0 %v1309
    %v1402 = vpop.f32.mrb[0].mxu0
    %v1403 = vadd.f32 0.0, %v1402
    %v1404 = vpop.f32.mrb[0].mxu0
    %1405 = vmatprep.mubr.f32.mxu0 0.0
    %1406 = vmatmul.mubr.f32.gmra.mrb[0].mxu0 %v1312
    %v1407 = vpop.f32.mrb[0].mxu0
    %v1408 = vadd.f32 0.0, %v1407
    %v1409 = vpop.f32.mrb[0].mxu0
    %1410 = vmatprep.mubr.f32.mxu0 0.0
    %1411 = vmatmul.mubr.f32.gmra.mrb[0].mxu0 %v1315
    %v1412 = vpop.f32.mrb[0].mxu0
    %v1413 = vadd.f32 0.0, %v1412
    %v1414 = vpop.f32.mrb[0].mxu0
    %1415 = vmatprep.mubr.f32.mxu0 0.0
    %1416 = vmatmul.mubr.f32.gmra.mrb[0].mxu0 %v1318
    %v1417 = vpop.f32.mrb[0].mxu0
    %v1418 = vadd.f32 0.0, %v1417
    %v1419 = vpop.f32.mrb[0].mxu0
    %1420 = vmatprep.mubr.f32.mxu0 0.0
    %1421 = vmatmul.mubr.f32.gmra.mrb[0].mxu0 %v1321
    %v1422 = vpop.f32.mrb[0].mxu0
    %v1423 = vadd.f32 0.0, %v1422
    %v1424 = vpop.f32.mrb[0].mxu0
    %1425 = vmatprep.mubr.f32.mxu0 0.0
    %1426 = vmatmul.mubr.f32.gmra.mrb[0].mxu0 %v1324
    %v1427 = vpop.f32.mrb[0].mxu0
    %v1428 = vadd.f32 0.0, %v1427
    %v1429 = vpop.f32.mrb[0].mxu0
    %1430 = vmatprep.mubr.f32.mxu0 0.0
    %1431 = vmatmul.mubr.f32.gmra.mrb[0].mxu0 %v1327
    %v1432 = vpop.f32.mrb[0].mxu0
    %v1433 = vadd.f32 0.0, %v1432
    %v1434 = vpop.f32.mrb[0].mxu0
    %1435 = vmatprep.mubr.f32.mxu0 0.0
    %1436 = vmatmul.mubr.f32.gmra.mrb[0].mxu0 %v1330
    %v1437 = vpop.f32.mrb[0].mxu0
    %v1438 = vadd.f32 0.0, %v1437
    %v1439 = vpop.f32.mrb[0].mxu0
    %1440 = vdwg.mxu0
    %v1441 = vmul.f32 %v1403, 0.35355338
    %v1442 = vmul.f32 %v1408, 0.35355338
    %v1443 = vmul.f32 %v1413, 0.35355338
    %v1444 = vmul.f32 %v1418, 0.35355338
    %v1445 = vmul.f32 %v1423, 0.35355338
    %v1446 = vmul.f32 %v1428, 0.35355338
    %v1447 = vmul.f32 %v1433, 0.35355338
    %v1448 = vmul.f32 %v1438, 0.35355338
    %v1449 = vadd.f32 %v1441, %v141
    %v1450 = vadd.f32 %v1442, %v142
    %v1451 = vadd.f32 %v1443, %v143
    %v1452 = vadd.f32 %v1444, %v144
    %v1453 = vadd.f32 %v1445, %v145
    %v1454 = vadd.f32 %v1446, %v146
    %v1455 = vadd.f32 %v1447, %v147
    %v1456 = vadd.f32 %v1448, %v148
    %v1457 = vsel %vm495, %v1449, -inf
    %1458 = vmax.xlane.f32.xlu0 %v1457
    %v1459 = vpop.xlane.xlu0 %1458
    %v1460 = vsel %vm495, %v1450, -inf
    %1461 = vmax.xlane.f32.xlu0 %v1460
    %v1462 = vpop.xlane.xlu0 %1461
    %v1463 = vsel %vm495, %v1451, -inf
    %1464 = vmax.xlane.f32.xlu0 %v1463
    %v1465 = vpop.xlane.xlu0 %1464
    %v1466 = vsel %vm495, %v1452, -inf
    %1467 = vmax.xlane.f32.xlu0 %v1466
    %v1468 = vpop.xlane.xlu0 %1467
    %v1469 = vsel %vm495, %v1453, -inf
    %1470 = vmax.xlane.f32.xlu0 %v1469
    %v1471 = vpop.xlane.xlu0 %1470
    %v1472 = vsel %vm495, %v1454, -inf
    %1473 = vmax.xlane.f32.xlu0 %v1472
    %v1474 = vpop.xlane.xlu0 %1473
    %v1475 = vsel %vm495, %v1455, -inf
    %1476 = vmax.xlane.f32.xlu0 %v1475
    %v1477 = vpop.xlane.xlu0 %1476
    %v1478 = vsel %vm495, %v1456, -inf
    %1479 = vmax.xlane.f32.xlu0 %v1478
    %v1480 = vpop.xlane.xlu0 %1479
    %v1481 = vsub.f32 %v1449, %v1459
    %v1482 = vsub.f32 %v1450, %v1462
    %v1483 = vsub.f32 %v1451, %v1465
    %v1484 = vsub.f32 %v1452, %v1468
    %v1485 = vsub.f32 %v1453, %v1471
    %v1486 = vsub.f32 %v1454, %v1474
    %v1487 = vsub.f32 %v1455, %v1477
    %v1488 = vsub.f32 %v1456, %v1480
    %v1489 = vmul.f32 %v1481, 1.442695
    %v1490 = vpow.pop %v1489
    %v1491 = vmul.f32 %v1482, 1.442695
    %v1492 = vpow.pop %v1491
    %v1493 = vmul.f32 %v1483, 1.442695
    %v1494 = vpow.pop %v1493
    %v1495 = vmul.f32 %v1484, 1.442695
    %v1496 = vpow.pop %v1495
    %v1497 = vmul.f32 %v1485, 1.442695
    %v1498 = vpow.pop %v1497
    %v1499 = vmul.f32 %v1486, 1.442695
    %v1500 = vpow.pop %v1499
    %v1501 = vmul.f32 %v1487, 1.442695
    %v1502 = vpow.pop %v1501
    %v1503 = vmul.f32 %v1488, 1.442695
    %v1504 = vpow.pop %v1503
    %v1505 = vsel %vm495, %v1490, 0.0
    %1506 = vadd.xlane.f32.xlu0 %v1505
    %v1507 = vpop.xlane.xlu0 %1506
    %v1508 = vsel %vm495, %v1492, 0.0
    %1509 = vadd.xlane.f32.xlu0 %v1508
    %v1510 = vpop.xlane.xlu0 %1509
    %v1511 = vsel %vm495, %v1494, 0.0
    %1512 = vadd.xlane.f32.xlu0 %v1511
    %v1513 = vpop.xlane.xlu0 %1512
    %v1514 = vsel %vm495, %v1496, 0.0
    %1515 = vadd.xlane.f32.xlu0 %v1514
    %v1516 = vpop.xlane.xlu0 %1515
    %v1517 = vsel %vm495, %v1498, 0.0
    %1518 = vadd.xlane.f32.xlu0 %v1517
    %v1519 = vpop.xlane.xlu0 %1518
    %v1520 = vsel %vm495, %v1500, 0.0
    %1521 = vadd.xlane.f32.xlu0 %v1520
    %v1522 = vpop.xlane.xlu0 %1521
    %v1523 = vsel %vm495, %v1502, 0.0
    %1524 = vadd.xlane.f32.xlu0 %v1523
    %v1525 = vpop.xlane.xlu0 %1524
    %v1526 = vsel %vm495, %v1504, 0.0
    %1527 = vadd.xlane.f32.xlu0 %v1526
    %v1528 = vpop.xlane.xlu0 %1527
    %v1529 = vrcp.pop %v1507
    %v1530 = vrcp.pop %v1510
    %v1531 = vrcp.pop %v1513
    %v1532 = vrcp.pop %v1516
    %v1533 = vrcp.pop %v1519
    %v1534 = vrcp.pop %v1522
    %v1535 = vrcp.pop %v1525
    %v1536 = vrcp.pop %v1528
    %v1537 = vmul.f32 %v1490, %v1529
    %v1538 = vmul.f32 %v1492, %v1530
    %v1539 = vmul.f32 %v1494, %v1531
    %v1540 = vmul.f32 %v1496, %v1532
    %v1541 = vmul.f32 %v1498, %v1533
    %v1542 = vmul.f32 %v1500, %v1534
    %v1543 = vmul.f32 %v1502, %v1535
    %v1544 = vmul.f32 %v1504, %v1536
    %1553 = vrot.lane.b32.xlu0 %v1294, 64
    %v1554 = vpop.permute.xlu0 %1553
    %1555 = vrot.lane.b32.xlu0 %v1295, 64
    %v1556 = vpop.permute.xlu0 %1555
    %1557 = vrot.lane.b32.xlu0 %v1296, 64
    %v1558 = vpop.permute.xlu0 %1557
    %1559 = vrot.lane.b32.xlu0 %v1297, 64
    %v1560 = vpop.permute.xlu0 %1559
    %1561 = vrot.lane.b32.xlu0 %v1298, 64
    %v1562 = vpop.permute.xlu0 %1561
    %1563 = vrot.lane.b32.xlu0 %v1299, 64
    %v1564 = vpop.permute.xlu0 %1563
    %1565 = vrot.lane.b32.xlu0 %v1300, 64
    %v1566 = vpop.permute.xlu0 %1565
    %1567 = vrot.lane.b32.xlu0 %v1301, 64
    %v1568 = vpop.permute.xlu0 %1567
    %v1578 = vsel %vm495, %v1537, 0
    %v1581 = vsel %vm495, %v1538, 0
    %v1584 = vsel %vm495, %v1539, 0
    %v1587 = vsel %vm495, %v1540, 0
    %v1590 = vsel %vm495, %v1541, 0
    %v1593 = vsel %vm495, %v1542, 0
    %v1596 = vsel %vm495, %v1543, 0
    %v1599 = vsel %vm495, %v1544, 0
    %1601 = vmatprep.subr.mxu0 0.0
    %1602 = vmatpush1.msra.mxu0 %v1554
    %1603 = vmatprep.subr.mxu0 0.0
    %1604 = vmatpush1.msra.mxu0 %v1556
    %1605 = vmatprep.subr.mxu0 0.0
    %1606 = vmatpush1.msra.mxu0 %v1558
    %1607 = vmatprep.subr.mxu0 0.0
    %1608 = vmatpush1.msra.mxu0 %v1560
    %1609 = vmatprep.subr.mxu0 0.0
    %1610 = vmatpush1.msra.mxu0 %v1562
    %1611 = vmatprep.subr.mxu0 0.0
    %1612 = vmatpush1.msra.mxu0 %v1564
    %1613 = vmatprep.subr.mxu0 0.0
    %1614 = vmatpush1.msra.mxu0 %v1566
    %1615 = vmatprep.subr.mxu0 0.0
    %1616 = vmatpush1.msra.mxu0 %v1568
    %1617 = vmatprep.subr.mxu0 0.0
    %1618 = vmatpush1.msra.mxu0 0.0
    %1619 = vmatprep.subr.mxu0 0.0
    %1620 = vmatpush1.msra.mxu0 0.0
    %1621 = vmatprep.subr.mxu0 0.0
    %1622 = vmatpush1.msra.mxu0 0.0
    %1623 = vmatprep.subr.mxu0 0.0
    %1624 = vmatpush1.msra.mxu0 0.0
    %1625 = vmatprep.subr.mxu0 0.0
    %1626 = vmatpush1.msra.mxu0 0.0
    %1627 = vmatprep.subr.mxu0 0.0
    %1628 = vmatpush1.msra.mxu0 0.0
    %1629 = vmatprep.subr.mxu0 0.0
    %1630 = vmatpush1.msra.mxu0 0.0
    %1631 = vmatprep.subr.mxu0 0.0
    %1632 = vmatpush1.msra.mxu0 0.0
    %1633 = vmatprep.subr.mxu0 0.0
    %1634 = vmatpush1.msra.mxu0 0.0
    %1635 = vmatprep.subr.mxu0 0.0
    %1636 = vmatpush1.msra.mxu0 0.0
    %1637 = vmatprep.subr.mxu0 0.0
    %1638 = vmatpush1.msra.mxu0 0.0
    %1639 = vmatprep.subr.mxu0 0.0
    %1640 = vmatpush1.msra.mxu0 0.0
    %1641 = vmatprep.subr.mxu0 0.0
    %1642 = vmatpush1.msra.mxu0 0.0
    %1643 = vmatprep.subr.mxu0 0.0
    %1644 = vmatpush1.msra.mxu0 0.0
    %1645 = vmatprep.subr.mxu0 0.0
    %1646 = vmatpush1.msra.mxu0 0.0
    %1647 = vmatprep.subr.mxu0 0.0
    %1648 = vmatpush1.msra.mxu0 0.0
    %1649 = vmatprep.subr.mxu0 0.0
    %1650 = vmatpush1.msra.mxu0 0.0
    %1651 = vmatprep.subr.mxu0 0.0
    %1652 = vmatpush1.msra.mxu0 0.0
    %1653 = vmatprep.subr.mxu0 0.0
    %1654 = vmatpush1.msra.mxu0 0.0
    %1655 = vmatprep.subr.mxu0 0.0
    %1656 = vmatpush1.msra.mxu0 0.0
    %1657 = vmatprep.subr.mxu0 0.0
    %1658 = vmatpush1.msra.mxu0 0.0
    %1659 = vmatprep.subr.mxu0 0.0
    %1660 = vmatpush1.msra.mxu0 0.0
    %1661 = vmatprep.subr.mxu0 0.0
    %1662 = vmatpush1.msra.mxu0 0.0
    %1663 = vmatprep.subr.mxu0 0.0
    %1664 = vmatpush1.msra.mxu0 0.0
    %1665 = vmatprep.mubr.f32.mxu0 0.0
    %1666 = vmatmul.mubr.f32.gmra.mrb[0].mxu0 %v1578
    %v1667 = vpop.f32.mrb[0].mxu0
    %v1668 = vadd.f32 0.0, %v1667
    %v1669 = vpop.f32.mrb[0].mxu0
    %1670 = vmatprep.mubr.f32.mxu0 0.0
    %1671 = vmatmul.mubr.f32.gmra.mrb[0].mxu0 %v1581
    %v1672 = vpop.f32.mrb[0].mxu0
    %v1673 = vadd.f32 0.0, %v1672
    %v1674 = vpop.f32.mrb[0].mxu0
    %1675 = vmatprep.mubr.f32.mxu0 0.0
    %1676 = vmatmul.mubr.f32.gmra.mrb[0].mxu0 %v1584
    %v1677 = vpop.f32.mrb[0].mxu0
    %v1678 = vadd.f32 0.0, %v1677
    %v1679 = vpop.f32.mrb[0].mxu0
    %1680 = vmatprep.mubr.f32.mxu0 0.0
    %1681 = vmatmul.mubr.f32.gmra.mrb[0].mxu0 %v1587
    %v1682 = vpop.f32.mrb[0].mxu0
    %v1683 = vadd.f32 0.0, %v1682
    %v1684 = vpop.f32.mrb[0].mxu0
    %1685 = vmatprep.mubr.f32.mxu0 0.0
    %1686 = vmatmul.mubr.f32.gmra.mrb[0].mxu0 %v1590
    %v1687 = vpop.f32.mrb[0].mxu0
    %v1688 = vadd.f32 0.0, %v1687
    %v1689 = vpop.f32.mrb[0].mxu0
    %1690 = vmatprep.mubr.f32.mxu0 0.0
    %1691 = vmatmul.mubr.f32.gmra.mrb[0].mxu0 %v1593
    %v1692 = vpop.f32.mrb[0].mxu0
    %v1693 = vadd.f32 0.0, %v1692
    %v1694 = vpop.f32.mrb[0].mxu0
    %1695 = vmatprep.mubr.f32.mxu0 0.0
    %1696 = vmatmul.mubr.f32.gmra.mrb[0].mxu0 %v1596
    %v1697 = vpop.f32.mrb[0].mxu0
    %v1698 = vadd.f32 0.0, %v1697
    %v1699 = vpop.f32.mrb[0].mxu0
    %1700 = vmatprep.mubr.f32.mxu0 0.0
    %1701 = vmatmul.mubr.f32.gmra.mrb[0].mxu0 %v1599
    %v1702 = vpop.f32.mrb[0].mxu0
    %v1703 = vadd.f32 0.0, %v1702
    %v1704 = vpop.f32.mrb[0].mxu0
    %1705 = vdwg.mxu0
    %1706 = vmatprep.subr.mxu0 0.0
    %1707 = vmatpush1.msra.mxu0 %v1668
    %1708 = vmatprep.subr.mxu0 0.0
    %1709 = vmatpush1.msra.mxu0 %v1673
    %1710 = vmatprep.subr.mxu0 0.0
    %1711 = vmatpush1.msra.mxu0 %v1678
    %1712 = vmatprep.subr.mxu0 0.0
    %1713 = vmatpush1.msra.mxu0 %v1683
    %1714 = vmatprep.subr.mxu0 0.0
    %1715 = vmatpush1.msra.mxu0 %v1688
    %1716 = vmatprep.subr.mxu0 0.0
    %1717 = vmatpush1.msra.mxu0 %v1693
    %1718 = vmatprep.subr.mxu0 0.0
    %1719 = vmatpush1.msra.mxu0 %v1698
    %1720 = vmatprep.subr.mxu0 0.0
    %1721 = vmatpush1.msra.mxu0 %v1703
    %1722 = vmatprep.subr.mxu0 0.0
    %1723 = vmatpush1.msra.mxu0 0.0
    %1724 = vmatprep.subr.mxu0 0.0
    %1725 = vmatpush1.msra.mxu0 0.0
    %1726 = vmatprep.subr.mxu0 0.0
    %1727 = vmatpush1.msra.mxu0 0.0
    %1728 = vmatprep.subr.mxu0 0.0
    %1729 = vmatpush1.msra.mxu0 0.0
    %1730 = vmatprep.subr.mxu0 0.0
    %1731 = vmatpush1.msra.mxu0 0.0
    %1732 = vmatprep.subr.mxu0 0.0
    %1733 = vmatpush1.msra.mxu0 0.0
    %1734 = vmatprep.subr.mxu0 0.0
    %1735 = vmatpush1.msra.mxu0 0.0
    %1736 = vmatprep.subr.mxu0 0.0
    %1737 = vmatpush1.msra.mxu0 0.0
    %1738 = vmatprep.subr.mxu0 0.0
    %1739 = vmatpush1.msra.mxu0 0.0
    %1740 = vmatprep.subr.mxu0 0.0
    %1741 = vmatpush1.msra.mxu0 0.0
    %1742 = vmatprep.subr.mxu0 0.0
    %1743 = vmatpush1.msra.mxu0 0.0
    %1744 = vmatprep.subr.mxu0 0.0
    %1745 = vmatpush1.msra.mxu0 0.0
    %1746 = vmatprep.subr.mxu0 0.0
    %1747 = vmatpush1.msra.mxu0 0.0
    %1748 = vmatprep.subr.mxu0 0.0
    %1749 = vmatpush1.msra.mxu0 0.0
    %1750 = vmatprep.subr.mxu0 0.0
    %1751 = vmatpush1.msra.mxu0 0.0
    %1752 = vmatprep.subr.mxu0 0.0
    %1753 = vmatpush1.msra.mxu0 0.0
    %1754 = vmatprep.subr.mxu0 0.0
    %1755 = vmatpush1.msra.mxu0 0.0
    %1756 = vmatprep.subr.mxu0 0.0
    %1757 = vmatpush1.msra.mxu0 0.0
    %1758 = vmatprep.subr.mxu0 0.0
    %1759 = vmatpush1.msra.mxu0 0.0
    %1760 = vmatprep.subr.mxu0 0.0
    %1761 = vmatpush1.msra.mxu0 0.0
    %1762 = vmatprep.subr.mxu0 0.0
    %1763 = vmatpush1.msra.mxu0 0.0
    %1764 = vmatprep.subr.mxu0 0.0
    %1765 = vmatpush1.msra.mxu0 0.0
    %1766 = vmatprep.subr.mxu0 0.0
    %1767 = vmatpush1.msra.mxu0 0.0
    %1768 = vmatprep.subr.mxu0 0.0
    %1769 = vmatpush1.msra.mxu0 0.0
    %1770 = vmatprep.mubr.f32.mxu0 0.0
    %1771 = vmatmul.mubr.f32.gmra.mrb[0].mxu0 %v746
    %v1772 = vpop.f32.mrb[0].mxu0
    %v1773 = vadd.f32 0.0, %v1772
    %v1774 = vpop.f32.mrb[0].mxu0
    %1775 = vmatprep.mubr.f32.mxu0 0.0
    %1776 = vmatmul.mubr.f32.gmra.mrb[0].mxu0 %v749
    %v1777 = vpop.f32.mrb[0].mxu0
    %v1778 = vadd.f32 0.0, %v1777
    %v1779 = vpop.f32.mrb[0].mxu0
    %1780 = vdwg.mxu0
    %v1781 = vld [vmem:[#allocation2 + $0x108] sm:$0xff]
    %v1782 = vld [vmem:[#allocation2 + $0x110] sm:$0xff]
    %v1783 = vld [vmem:[#allocation2 + $0x118] sm:$0xff]
    %v1784 = vld [vmem:[#allocation2 + $0x120] sm:$0xff]
    %v1785 = vlaneseq
    %v1786 = vshrl.u32 %v1785, 7
    %v1787 = vsub.s32 0, %v1786
    %v1788 = vrot.slane %v1150, %v1787
    %v1790 = vsel %vm159, %v1773, 0
    %v1793 = vsel %vm159, %v1778, 0
    %1795 = vmatprep.subr.mxu0 0.0
    %1796 = vmatpush1.msra.mxu0 %v1781
    %1797 = vmatprep.subr.mxu0 0.0
    %1798 = vmatpush1.msra.mxu0 %v1782
    %1799 = vmatprep.subr.mxu0 0.0
    %1800 = vmatpush1.msra.mxu0 %v1783
    %1801 = vmatprep.subr.mxu0 0.0
    %1802 = vmatpush1.msra.mxu0 %v1784
    %1803 = vmatprep.subr.mxu0 0.0
    %1804 = vmatpush1.msra.mxu0 0.0
    %1805 = vmatprep.subr.mxu0 0.0
    %1806 = vmatpush1.msra.mxu0 0.0
    %1807 = vmatprep.subr.mxu0 0.0
    %1808 = vmatpush1.msra.mxu0 0.0
    %1809 = vmatprep.subr.mxu0 0.0
    %1810 = vmatpush1.msra.mxu0 0.0
    %1811 = vmatprep.subr.mxu0 0.0
    %1812 = vmatpush1.msra.mxu0 0.0
    %1813 = vmatprep.subr.mxu0 0.0
    %1814 = vmatpush1.msra.mxu0 0.0
    %1815 = vmatprep.subr.mxu0 0.0
    %1816 = vmatpush1.msra.mxu0 0.0
    %1817 = vmatprep.subr.mxu0 0.0
    %1818 = vmatpush1.msra.mxu0 0.0
    %1819 = vmatprep.subr.mxu0 0.0
    %1820 = vmatpush1.msra.mxu0 0.0
    %1821 = vmatprep.subr.mxu0 0.0
    %1822 = vmatpush1.msra.mxu0 0.0
    %1823 = vmatprep.subr.mxu0 0.0
    %1824 = vmatpush1.msra.mxu0 0.0
    %1825 = vmatprep.subr.mxu0 0.0
    %1826 = vmatpush1.msra.mxu0 0.0
    %1827 = vmatprep.subr.mxu0 0.0
    %1828 = vmatpush1.msra.mxu0 0.0
    %1829 = vmatprep.subr.mxu0 0.0
    %1830 = vmatpush1.msra.mxu0 0.0
    %1831 = vmatprep.subr.mxu0 0.0
    %1832 = vmatpush1.msra.mxu0 0.0
    %1833 = vmatprep.subr.mxu0 0.0
    %1834 = vmatpush1.msra.mxu0 0.0
    %1835 = vmatprep.subr.mxu0 0.0
    %1836 = vmatpush1.msra.mxu0 0.0
    %1837 = vmatprep.subr.mxu0 0.0
    %1838 = vmatpush1.msra.mxu0 0.0
    %1839 = vmatprep.subr.mxu0 0.0
    %1840 = vmatpush1.msra.mxu0 0.0
    %1841 = vmatprep.subr.mxu0 0.0
    %1842 = vmatpush1.msra.mxu0 0.0
    %1843 = vmatprep.subr.mxu0 0.0
    %1844 = vmatpush1.msra.mxu0 0.0
    %1845 = vmatprep.subr.mxu0 0.0
    %1846 = vmatpush1.msra.mxu0 0.0
    %1847 = vmatprep.subr.mxu0 0.0
    %1848 = vmatpush1.msra.mxu0 0.0
    %1849 = vmatprep.subr.mxu0 0.0
    %1850 = vmatpush1.msra.mxu0 0.0
    %1851 = vmatprep.subr.mxu0 0.0
    %1852 = vmatpush1.msra.mxu0 0.0
    %1853 = vmatprep.subr.mxu0 0.0
    %1854 = vmatpush1.msra.mxu0 0.0
    %1855 = vmatprep.subr.mxu0 0.0
    %1856 = vmatpush1.msra.mxu0 0.0
    %1857 = vmatprep.subr.mxu0 0.0
    %1858 = vmatpush1.msra.mxu0 0.0
    %1859 = vmatprep.mubr.f32.mxu0 0.0
    %1860 = vmatmul.mubr.f32.gmra.mrb[0].mxu0 %v1790
    %v1861 = vpop.f32.mrb[0].mxu0
    %v1862 = vadd.f32 %v1788, %v1861
    %v1863 = vpop.f32.mrb[0].mxu0
    %1864 = vmatprep.mubr.f32.mxu0 0.0
    %1865 = vmatmul.mubr.f32.gmra.mrb[0].mxu0 %v1793
    %v1866 = vpop.f32.mrb[0].mxu0
    %v1867 = vadd.f32 %v1788, %v1866
    %v1868 = vpop.f32.mrb[0].mxu0
    %1869 = vdwg.mxu0
    %v1870 = vadd.f32 %v1145, %v1862
    %v1871 = vadd.f32 %v1146, %v1867
    %v1872 = vsel %vm159, %v1870, 0.0
    %1873 = vadd.xlane.f32.xlu0 %v1872
    %v1874 = vpop.xlane.xlu0 %1873
    %v1875 = vsel %vm159, %v1871, 0.0
    %1876 = vadd.xlane.f32.xlu0 %v1875
    %v1877 = vpop.xlane.xlu0 %1876
    %v1878 = vmul.f32 %v1874, %v166
    %v1879 = vmul.f32 %v1877, %v166
    %v1880 = vmul.f32 %v1870, %v1870
    %v1881 = vmul.f32 %v1871, %v1871
    %v1882 = vsel %vm159, %v1880, 0.0
    %1883 = vadd.xlane.f32.xlu0 %v1882
    %v1884 = vpop.xlane.xlu0 %1883
    %v1885 = vsel %vm159, %v1881, 0.0
    %1886 = vadd.xlane.f32.xlu0 %v1885
    %v1887 = vpop.xlane.xlu0 %1886
    %v1888 = vmul.f32 %v1884, %v166
    %v1889 = vmul.f32 %v1887, %v166
    %v1890 = vmul.f32 %v1878, %v1878
    %v1891 = vmul.f32 %v1879, %v1879
    %v1892 = vsub.f32 %v1888, %v1890
    %v1893 = vsub.f32 %v1889, %v1891
    %v1894 = vsub.f32 %v1870, %v1878
    %v1895 = vsub.f32 %v1871, %v1879
    %v1896 = vadd.f32 %v1892, 1e-05
    %v1897 = vadd.f32 %v1893, 1e-05
    %v1898 = vrsqrt.pop %v1896
    %v1899 = vrsqrt.pop %v1897
    %v1900 = vmul.f32 %v1894, %v1898
    %v1901 = vmul.f32 %v1895, %v1899
    %v1902 = vlaneseq
    %v1903 = vshrl.u32 %v1902, 7
    %v1904 = vsub.s32 0, %v1903
    %v1905 = vrot.slane %v1151, %v1904
    %v1906 = vmul.f32 %v1900, %v1905
    %v1907 = vmul.f32 %v1901, %v1905
    %v1908 = vlaneseq
    %v1909 = vshrl.u32 %v1908, 7
    %v1910 = vsub.s32 0, %v1909
    %v1911 = vrot.slane %v1152, %v1910
    %v1912 = vadd.f32 %v1906, %v1911
    %v1913 = vadd.f32 %v1907, %v1911
    %v1914 = vld [vmem:[#allocation2 + $0x128] sm:$0xff]
    %v1915 = vld [vmem:[#allocation2 + $0x130] sm:$0xff]
    %v1916 = vld [vmem:[#allocation2 + $0x138] sm:$0xff]
    %v1917 = vld [vmem:[#allocation2 + $0x140] sm:$0xff]
    %v1918 = vlaneseq
    %v1919 = vshrl.u32 %v1918, 7
    %v1920 = vsub.s32 0, %v1919
    %v1921 = vrot.slane %v1153, %v1920
    %v1923 = vsel %vm159, %v1912, 0
    %v1926 = vsel %vm159, %v1913, 0
    %1928 = vmatprep.subr.mxu0 0.0
    %1929 = vmatpush1.msra.mxu0 %v1914
    %1930 = vmatprep.subr.mxu0 0.0
    %1931 = vmatpush1.msra.mxu0 %v1915
    %1932 = vmatprep.subr.mxu0 0.0
    %1933 = vmatpush1.msra.mxu0 %v1916
    %1934 = vmatprep.subr.mxu0 0.0
    %1935 = vmatpush1.msra.mxu0 %v1917
    %1936 = vmatprep.subr.mxu0 0.0
    %1937 = vmatpush1.msra.mxu0 0.0
    %1938 = vmatprep.subr.mxu0 0.0
    %1939 = vmatpush1.msra.mxu0 0.0
    %1940 = vmatprep.subr.mxu0 0.0
    %1941 = vmatpush1.msra.mxu0 0.0
    %1942 = vmatprep.subr.mxu0 0.0
    %1943 = vmatpush1.msra.mxu0 0.0
    %1944 = vmatprep.subr.mxu0 0.0
    %1945 = vmatpush1.msra.mxu0 0.0
    %1946 = vmatprep.subr.mxu0 0.0
    %1947 = vmatpush1.msra.mxu0 0.0
    %1948 = vmatprep.subr.mxu0 0.0
    %1949 = vmatpush1.msra.mxu0 0.0
    %1950 = vmatprep.subr.mxu0 0.0
    %1951 = vmatpush1.msra.mxu0 0.0
    %1952 = vmatprep.subr.mxu0 0.0
    %1953 = vmatpush1.msra.mxu0 0.0
    %1954 = vmatprep.subr.mxu0 0.0
    %1955 = vmatpush1.msra.mxu0 0.0
    %1956 = vmatprep.subr.mxu0 0.0
    %1957 = vmatpush1.msra.mxu0 0.0
    %1958 = vmatprep.subr.mxu0 0.0
    %1959 = vmatpush1.msra.mxu0 0.0
    %1960 = vmatprep.subr.mxu0 0.0
    %1961 = vmatpush1.msra.mxu0 0.0
    %1962 = vmatprep.subr.mxu0 0.0
    %1963 = vmatpush1.msra.mxu0 0.0
    %1964 = vmatprep.subr.mxu0 0.0
    %1965 = vmatpush1.msra.mxu0 0.0
    %1966 = vmatprep.subr.mxu0 0.0
    %1967 = vmatpush1.msra.mxu0 0.0
    %1968 = vmatprep.subr.mxu0 0.0
    %1969 = vmatpush1.msra.mxu0 0.0
    %1970 = vmatprep.subr.mxu0 0.0
    %1971 = vmatpush1.msra.mxu0 0.0
    %1972 = vmatprep.subr.mxu0 0.0
    %1973 = vmatpush1.msra.mxu0 0.0
    %1974 = vmatprep.subr.mxu0 0.0
    %1975 = vmatpush1.msra.mxu0 0.0
    %1976 = vmatprep.subr.mxu0 0.0
    %1977 = vmatpush1.msra.mxu0 0.0
    %1978 = vmatprep.subr.mxu0 0.0
    %1979 = vmatpush1.msra.mxu0 0.0
    %1980 = vmatprep.subr.mxu0 0.0
    %1981 = vmatpush1.msra.mxu0 0.0
    %1982 = vmatprep.subr.mxu0 0.0
    %1983 = vmatpush1.msra.mxu0 0.0
    %1984 = vmatprep.subr.mxu0 0.0
    %1985 = vmatpush1.msra.mxu0 0.0
    %1986 = vmatprep.subr.mxu0 0.0
    %1987 = vmatpush1.msra.mxu0 0.0
    %1988 = vmatprep.subr.mxu0 0.0
    %1989 = vmatpush1.msra.mxu0 0.0
    %1990 = vmatprep.subr.mxu0 0.0
    %1991 = vmatpush1.msra.mxu0 0.0
    %1992 = vmatprep.mubr.f32.mxu0 0.0
    %1993 = vmatmul.mubr.f32.gmra.mrb[0].mxu0 %v1923
    %v1994 = vpop.f32.mrb[0].mxu0
    %v1995 = vadd.f32 %v1921, %v1994
    %v1996 = vpop.f32.mrb[0].mxu0
    %1997 = vmatprep.mubr.f32.mxu0 0.0
    %1998 = vmatmul.mubr.f32.gmra.mrb[0].mxu0 %v1926
    %v1999 = vpop.f32.mrb[0].mxu0
    %v2000 = vadd.f32 %v1921, %v1999
    %v2001 = vpop.f32.mrb[0].mxu0
    %2002 = vdwg.mxu0
    %v2003 = vmax.f32 %v1995, 0.0
    %v2004 = vmax.f32 %v2000, 0.0
    %v2005 = vld [vmem:[#allocation2 + $0x148] sm:$0xff]
    %v2006 = vld [vmem:[#allocation2 + $0x150] sm:$0xff]
    %v2007 = vld [vmem:[#allocation2 + $0x158] sm:$0xff]
    %v2008 = vld [vmem:[#allocation2 + $0x160] sm:$0xff]
    %v2009 = vld [vmem:[#allocation2 + $0x168] sm:$0xff]
    %v2010 = vld [vmem:[#allocation2 + $0x170] sm:$0xff]
    %v2011 = vld [vmem:[#allocation2 + $0x178] sm:$0xff]
    %v2012 = vld [vmem:[#allocation2 + $0x180] sm:$0xff]
    %v2014 = vsel %vm495, %v2003, 0
    %v2017 = vsel %vm495, %v2004, 0
    %2019 = vmatprep.subr.mxu0 0.0
    %2020 = vmatpush1.msra.mxu0 %v2005
    %2021 = vmatprep.subr.mxu0 0.0
    %2022 = vmatpush1.msra.mxu0 %v2006
    %2023 = vmatprep.subr.mxu0 0.0
    %2024 = vmatpush1.msra.mxu0 %v2007
    %2025 = vmatprep.subr.mxu0 0.0
    %2026 = vmatpush1.msra.mxu0 %v2008
    %2027 = vmatprep.subr.mxu0 0.0
    %2028 = vmatpush1.msra.mxu0 %v2009
    %2029 = vmatprep.subr.mxu0 0.0
    %2030 = vmatpush1.msra.mxu0 %v2010
    %2031 = vmatprep.subr.mxu0 0.0
    %2032 = vmatpush1.msra.mxu0 %v2011
    %2033 = vmatprep.subr.mxu0 0.0
    %2034 = vmatpush1.msra.mxu0 %v2012
    %2035 = vmatprep.subr.mxu0 0.0
    %2036 = vmatpush1.msra.mxu0 0.0
    %2037 = vmatprep.subr.mxu0 0.0
    %2038 = vmatpush1.msra.mxu0 0.0
    %2039 = vmatprep.subr.mxu0 0.0
    %2040 = vmatpush1.msra.mxu0 0.0
    %2041 = vmatprep.subr.mxu0 0.0
    %2042 = vmatpush1.msra.mxu0 0.0
    %2043 = vmatprep.subr.mxu0 0.0
    %2044 = vmatpush1.msra.mxu0 0.0
    %2045 = vmatprep.subr.mxu0 0.0
    %2046 = vmatpush1.msra.mxu0 0.0
    %2047 = vmatprep.subr.mxu0 0.0
    %2048 = vmatpush1.msra.mxu0 0.0
    %2049 = vmatprep.subr.mxu0 0.0
    %2050 = vmatpush1.msra.mxu0 0.0
    %2051 = vmatprep.subr.mxu0 0.0
    %2052 = vmatpush1.msra.mxu0 0.0
    %2053 = vmatprep.subr.mxu0 0.0
    %2054 = vmatpush1.msra.mxu0 0.0
    %2055 = vmatprep.subr.mxu0 0.0
    %2056 = vmatpush1.msra.mxu0 0.0
    %2057 = vmatprep.subr.mxu0 0.0
    %2058 = vmatpush1.msra.mxu0 0.0
    %2059 = vmatprep.subr.mxu0 0.0
    %2060 = vmatpush1.msra.mxu0 0.0
    %2061 = vmatprep.subr.mxu0 0.0
    %2062 = vmatpush1.msra.mxu0 0.0
    %2063 = vmatprep.subr.mxu0 0.0
    %2064 = vmatpush1.msra.mxu0 0.0
    %2065 = vmatprep.subr.mxu0 0.0
    %2066 = vmatpush1.msra.mxu0 0.0
    %2067 = vmatprep.subr.mxu0 0.0
    %2068 = vmatpush1.msra.mxu0 0.0
    %2069 = vmatprep.subr.mxu0 0.0
    %2070 = vmatpush1.msra.mxu0 0.0
    %2071 = vmatprep.subr.mxu0 0.0
    %2072 = vmatpush1.msra.mxu0 0.0
    %2073 = vmatprep.subr.mxu0 0.0
    %2074 = vmatpush1.msra.mxu0 0.0
    %2075 = vmatprep.subr.mxu0 0.0
    %2076 = vmatpush1.msra.mxu0 0.0
    %2077 = vmatprep.subr.mxu0 0.0
    %2078 = vmatpush1.msra.mxu0 0.0
    %2079 = vmatprep.subr.mxu0 0.0
    %2080 = vmatpush1.msra.mxu0 0.0
    %2081 = vmatprep.subr.mxu0 0.0
    %2082 = vmatpush1.msra.mxu0 0.0
    %2083 = vmatprep.mubr.f32.mxu0 0.0
    %2084 = vmatmul.mubr.f32.gmra.mrb[0].mxu0 %v2014
    %v2085 = vpop.f32.mrb[0].mxu0
    %v2086 = vadd.f32 0.0, %v2085
    %v2087 = vpop.f32.mrb[0].mxu0
    %2088 = vmatprep.mubr.f32.mxu0 0.0
    %2089 = vmatmul.mubr.f32.gmra.mrb[0].mxu0 %v2017
    %v2090 = vpop.f32.mrb[0].mxu0
    %v2091 = vadd.f32 0.0, %v2090
    %v2092 = vpop.f32.mrb[0].mxu0
    %2093 = vdwg.mxu0
    %v2094 = vadd.f32 %v1870, %v2086
    %v2095 = vadd.f32 %v1871, %v2091
    %v2096 = vlaneseq
    %v2097 = vshrl.u32 %v2096, 7
    %v2098 = vsub.s32 0, %v2097
    %v2099 = vrot.slane %v1154, %v2098
    %v2100 = vadd.f32 %v2094, %v2099
    %v2101 = vadd.f32 %v2095, %v2099
    %v2102 = vld [vmem:[#allocation2 + $0x258] sm:$0x3]
    %vm2103 = vcmask 130048
    %v2105 = vsel %vm2103, %v2102, 0
    %2107 = vmatprep.subr.mxu0 0.0
    %2108 = vmatpush1.msra.mxu0 %v2100
    %2109 = vmatprep.subr.mxu0 0.0
    %2110 = vmatpush1.msra.mxu0 %v2101
    %2111 = vmatprep.subr.mxu0 0.0
    %2112 = vmatpush1.msra.mxu0 0.0
    %2113 = vmatprep.subr.mxu0 0.0
    %2114 = vmatpush1.msra.mxu0 0.0
    %2115 = vmatprep.subr.mxu0 0.0
    %2116 = vmatpush1.msra.mxu0 0.0
    %2117 = vmatprep.subr.mxu0 0.0
    %2118 = vmatpush1.msra.mxu0 0.0
    %2119 = vmatprep.subr.mxu0 0.0
    %2120 = vmatpush1.msra.mxu0 0.0
    %2121 = vmatprep.subr.mxu0 0.0
    %2122 = vmatpush1.msra.mxu0 0.0
    %2123 = vmatprep.subr.mxu0 0.0
    %2124 = vmatpush1.msra.mxu0 0.0
    %2125 = vmatprep.subr.mxu0 0.0
    %2126 = vmatpush1.msra.mxu0 0.0
    %2127 = vmatprep.subr.mxu0 0.0
    %2128 = vmatpush1.msra.mxu0 0.0
    %2129 = vmatprep.subr.mxu0 0.0
    %2130 = vmatpush1.msra.mxu0 0.0
    %2131 = vmatprep.subr.mxu0 0.0
    %2132 = vmatpush1.msra.mxu0 0.0
    %2133 = vmatprep.subr.mxu0 0.0
    %2134 = vmatpush1.msra.mxu0 0.0
    %2135 = vmatprep.subr.mxu0 0.0
    %2136 = vmatpush1.msra.mxu0 0.0
    %2137 = vmatprep.subr.mxu0 0.0
    %2138 = vmatpush1.msra.mxu0 0.0
    %2139 = vmatprep.subr.mxu0 0.0
    %2140 = vmatpush1.msra.mxu0 0.0
    %2141 = vmatprep.subr.mxu0 0.0
    %2142 = vmatpush1.msra.mxu0 0.0
    %2143 = vmatprep.subr.mxu0 0.0
    %2144 = vmatpush1.msra.mxu0 0.0
    %2145 = vmatprep.subr.mxu0 0.0
    %2146 = vmatpush1.msra.mxu0 0.0
    %2147 = vmatprep.subr.mxu0 0.0
    %2148 = vmatpush1.msra.mxu0 0.0
    %2149 = vmatprep.subr.mxu0 0.0
    %2150 = vmatpush1.msra.mxu0 0.0
    %2151 = vmatprep.subr.mxu0 0.0
    %2152 = vmatpush1.msra.mxu0 0.0
    %2153 = vmatprep.subr.mxu0 0.0
    %2154 = vmatpush1.msra.mxu0 0.0
    %2155 = vmatprep.subr.mxu0 0.0
    %2156 = vmatpush1.msra.mxu0 0.0
    %2157 = vmatprep.subr.mxu0 0.0
    %2158 = vmatpush1.msra.mxu0 0.0
    %2159 = vmatprep.subr.mxu0 0.0
    %2160 = vmatpush1.msra.mxu0 0.0
    %2161 = vmatprep.subr.mxu0 0.0
    %2162 = vmatpush1.msra.mxu0 0.0
    %2163 = vmatprep.subr.mxu0 0.0
    %2164 = vmatpush1.msra.mxu0 0.0
    %2165 = vmatprep.subr.mxu0 0.0
    %2166 = vmatpush1.msra.mxu0 0.0
    %2167 = vmatprep.subr.mxu0 0.0
    %2168 = vmatpush1.msra.mxu0 0.0
    %2169 = vmatprep.subr.mxu0 0.0
    %2170 = vmatpush1.msra.mxu0 0.0
    %2171 = vmatprep.mubr.f32.mxu0 0.0
    %2172 = vmatmul.mubr.f32.gmra.mrb[0].mxu0 %v2105
    %v2173 = vpop.f32.mrb[0].mxu0
    %v2174 = vadd.f32 0.0, %v2173
    %v2175 = vpop.f32.mrb[0].mxu0
    %2176 = vdwg.mxu0
    %v2177 = vld [vmem:[#allocation2 + $0x270] sm:$0x1]
    %v2178 = vld [vmem:[#allocation2 + $0x271] sm:$0x1]
    %v2179 = vld [vmem:[#allocation2 + $0x188] sm:$0xff]
    %v2180 = vld [vmem:[#allocation2 + $0x190] sm:$0xff]
    %v2181 = vld [vmem:[#allocation2 + $0x198] sm:$0xff]
    %v2182 = vld [vmem:[#allocation2 + $0x1a0] sm:$0xff]
    %v2183 = vlaneseq
    %v2184 = vshrl.u32 %v2183, 7
    %v2185 = vsub.s32 0, %v2184
    %v2186 = vrot.slane %v2177, %v2185
    %v2188 = vsel %vm159, %v2174, 0
    %2190 = vmatprep.subr.mxu0 0.0
    %2191 = vmatpush1.msra.mxu0 %v2179
    %2192 = vmatprep.subr.mxu0 0.0
    %2193 = vmatpush1.msra.mxu0 %v2180
    %2194 = vmatprep.subr.mxu0 0.0
    %2195 = vmatpush1.msra.mxu0 %v2181
    %2196 = vmatprep.subr.mxu0 0.0
    %2197 = vmatpush1.msra.mxu0 %v2182
    %2198 = vmatprep.subr.mxu0 0.0
    %2199 = vmatpush1.msra.mxu0 0.0
    %2200 = vmatprep.subr.mxu0 0.0
    %2201 = vmatpush1.msra.mxu0 0.0
    %2202 = vmatprep.subr.mxu0 0.0
    %2203 = vmatpush1.msra.mxu0 0.0
    %2204 = vmatprep.subr.mxu0 0.0
    %2205 = vmatpush1.msra.mxu0 0.0
    %2206 = vmatprep.subr.mxu0 0.0
    %2207 = vmatpush1.msra.mxu0 0.0
    %2208 = vmatprep.subr.mxu0 0.0
    %2209 = vmatpush1.msra.mxu0 0.0
    %2210 = vmatprep.subr.mxu0 0.0
    %2211 = vmatpush1.msra.mxu0 0.0
    %2212 = vmatprep.subr.mxu0 0.0
    %2213 = vmatpush1.msra.mxu0 0.0
    %2214 = vmatprep.subr.mxu0 0.0
    %2215 = vmatpush1.msra.mxu0 0.0
    %2216 = vmatprep.subr.mxu0 0.0
    %2217 = vmatpush1.msra.mxu0 0.0
    %2218 = vmatprep.subr.mxu0 0.0
    %2219 = vmatpush1.msra.mxu0 0.0
    %2220 = vmatprep.subr.mxu0 0.0
    %2221 = vmatpush1.msra.mxu0 0.0
    %2222 = vmatprep.subr.mxu0 0.0
    %2223 = vmatpush1.msra.mxu0 0.0
    %2224 = vmatprep.subr.mxu0 0.0
    %2225 = vmatpush1.msra.mxu0 0.0
    %2226 = vmatprep.subr.mxu0 0.0
    %2227 = vmatpush1.msra.mxu0 0.0
    %2228 = vmatprep.subr.mxu0 0.0
    %2229 = vmatpush1.msra.mxu0 0.0
    %2230 = vmatprep.subr.mxu0 0.0
    %2231 = vmatpush1.msra.mxu0 0.0
    %2232 = vmatprep.subr.mxu0 0.0
    %2233 = vmatpush1.msra.mxu0 0.0
    %2234 = vmatprep.subr.mxu0 0.0
    %2235 = vmatpush1.msra.mxu0 0.0
    %2236 = vmatprep.subr.mxu0 0.0
    %2237 = vmatpush1.msra.mxu0 0.0
    %2238 = vmatprep.subr.mxu0 0.0
    %2239 = vmatpush1.msra.mxu0 0.0
    %2240 = vmatprep.subr.mxu0 0.0
    %2241 = vmatpush1.msra.mxu0 0.0
    %2242 = vmatprep.subr.mxu0 0.0
    %2243 = vmatpush1.msra.mxu0 0.0
    %2244 = vmatprep.subr.mxu0 0.0
    %2245 = vmatpush1.msra.mxu0 0.0
    %2246 = vmatprep.subr.mxu0 0.0
    %2247 = vmatpush1.msra.mxu0 0.0
    %2248 = vmatprep.subr.mxu0 0.0
    %2249 = vmatpush1.msra.mxu0 0.0
    %2250 = vmatprep.subr.mxu0 0.0
    %2251 = vmatpush1.msra.mxu0 0.0
    %2252 = vmatprep.subr.mxu0 0.0
    %2253 = vmatpush1.msra.mxu0 0.0
    %2254 = vmatprep.mubr.f32.mxu0 0.0
    %2255 = vmatmul.mubr.f32.gmra.mrb[0].mxu0 %v2188
    %v2256 = vpop.f32.mrb[0].mxu0
    %v2257 = vadd.f32 %v2186, %v2256
    %v2258 = vpop.f32.mrb[0].mxu0
    %2259 = vdwg.mxu0
    %v2260 = vmax.f32 %v2257, 0.0
    %v2261 = vld [vmem:[#allocation2 + $0x1a8] sm:$0xff]
    %v2262 = vld [vmem:[#allocation2 + $0x1b0] sm:$0xff]
    %v2263 = vld [vmem:[#allocation2 + $0x1b8] sm:$0xff]
    %v2264 = vld [vmem:[#allocation2 + $0x1c0] sm:$0xff]
    %v2265 = vlaneseq
    %v2266 = vshrl.u32 %v2265, 7
    %v2267 = vsub.s32 0, %v2266
    %v2268 = vrot.slane %v2178, %v2267
    %v2270 = vsel %vm159, %v2260, 0
    %2272 = vmatprep.subr.mxu0 0.0
    %2273 = vmatpush1.msra.mxu0 %v2261
    %2274 = vmatprep.subr.mxu0 0.0
    %2275 = vmatpush1.msra.mxu0 %v2262
    %2276 = vmatprep.subr.mxu0 0.0
    %2277 = vmatpush1.msra.mxu0 %v2263
    %2278 = vmatprep.subr.mxu0 0.0
    %2279 = vmatpush1.msra.mxu0 %v2264
    %2280 = vmatprep.subr.mxu0 0.0
    %2281 = vmatpush1.msra.mxu0 0.0
    %2282 = vmatprep.subr.mxu0 0.0
    %2283 = vmatpush1.msra.mxu0 0.0
    %2284 = vmatprep.subr.mxu0 0.0
    %2285 = vmatpush1.msra.mxu0 0.0
    %2286 = vmatprep.subr.mxu0 0.0
    %2287 = vmatpush1.msra.mxu0 0.0
    %2288 = vmatprep.subr.mxu0 0.0
    %2289 = vmatpush1.msra.mxu0 0.0
    %2290 = vmatprep.subr.mxu0 0.0
    %2291 = vmatpush1.msra.mxu0 0.0
    %2292 = vmatprep.subr.mxu0 0.0
    %2293 = vmatpush1.msra.mxu0 0.0
    %2294 = vmatprep.subr.mxu0 0.0
    %2295 = vmatpush1.msra.mxu0 0.0
    %2296 = vmatprep.subr.mxu0 0.0
    %2297 = vmatpush1.msra.mxu0 0.0
    %2298 = vmatprep.subr.mxu0 0.0
    %2299 = vmatpush1.msra.mxu0 0.0
    %2300 = vmatprep.subr.mxu0 0.0
    %2301 = vmatpush1.msra.mxu0 0.0
    %2302 = vmatprep.subr.mxu0 0.0
    %2303 = vmatpush1.msra.mxu0 0.0
    %2304 = vmatprep.subr.mxu0 0.0
    %2305 = vmatpush1.msra.mxu0 0.0
    %2306 = vmatprep.subr.mxu0 0.0
    %2307 = vmatpush1.msra.mxu0 0.0
    %2308 = vmatprep.subr.mxu0 0.0
    %2309 = vmatpush1.msra.mxu0 0.0
    %2310 = vmatprep.subr.mxu0 0.0
    %2311 = vmatpush1.msra.mxu0 0.0
    %2312 = vmatprep.subr.mxu0 0.0
    %2313 = vmatpush1.msra.mxu0 0.0
    %2314 = vmatprep.subr.mxu0 0.0
    %2315 = vmatpush1.msra.mxu0 0.0
    %2316 = vmatprep.subr.mxu0 0.0
    %2317 = vmatpush1.msra.mxu0 0.0
    %2318 = vmatprep.subr.mxu0 0.0
    %2319 = vmatpush1.msra.mxu0 0.0
    %2320 = vmatprep.subr.mxu0 0.0
    %2321 = vmatpush1.msra.mxu0 0.0
    %2322 = vmatprep.subr.mxu0 0.0
    %2323 = vmatpush1.msra.mxu0 0.0
    %2324 = vmatprep.subr.mxu0 0.0
    %2325 = vmatpush1.msra.mxu0 0.0
    %2326 = vmatprep.subr.mxu0 0.0
    %2327 = vmatpush1.msra.mxu0 0.0
    %2328 = vmatprep.subr.mxu0 0.0
    %2329 = vmatpush1.msra.mxu0 0.0
    %2330 = vmatprep.subr.mxu0 0.0
    %2331 = vmatpush1.msra.mxu0 0.0
    %2332 = vmatprep.subr.mxu0 0.0
    %2333 = vmatpush1.msra.mxu0 0.0
    %2334 = vmatprep.subr.mxu0 0.0
    %2335 = vmatpush1.msra.mxu0 0.0
    %2336 = vmatprep.mubr.f32.mxu0 0.0
    %2337 = vmatmul.mubr.f32.gmra.mrb[0].mxu0 %v2270
    %v2338 = vpop.f32.mrb[0].mxu0
    %v2339 = vadd.f32 %v2268, %v2338
    %v2340 = vpop.f32.mrb[0].mxu0
    %2341 = vdwg.mxu0
    %vm2342 = vcmask 25600
    %2343 = vst.msk [vmem:[#allocation5] sm:$0x3] %vm2342, %v2339
    // Predicated region
    $region14: #{mean_transformer_encoder.1} parent=1 // pred_check
      _
    $region15: #{mean_transformer_encoder.1} parent=1 // pred_check_branch
      %2345 = sbr.rel (0) target = $region17
    $region16: #{mean_transformer_encoder.1} parent=1 // pred_region
      %s2347 = ssub.s32 32, 32
      %2348 = vsyncadd [#allocation4], %s2347
      %s2350 = sshll.u32 [#allocation5], 4
      %s2351 = int_to_ptr.vmem [resolvable:$true] %s2350
      %2353 = dma.vmem_to_hbm [thread:$0]  %s2351, 32, %s2, [#allocation4]
    $region17: #{mean_transformer_encoder.1} parent=1 // pred_fallthru
      _
    // Predicated region
    $region18: #{mean_transformer_encoder.1} parent=1 // pred_check
      _
    $region19: #{mean_transformer_encoder.1} parent=1 // pred_check_branch
      %2355 = sbr.rel (0) target = $region21
    $region20: #{mean_transformer_encoder.1} parent=1 // pred_region
      %2356 = dma.done [#allocation4], 32
    $region21: #{mean_transformer_encoder.1} parent=1 // pred_fallthru
      _
    %2357 = vsyncpa [#allocation3], 1
    %2358 = vsyncpa [#allocation4], 1

</llo_original>
